<compile_context>
chip_gen: v5e
topology: v5e:2x2
jax: 0.10.0
libtpu: 0.0.40
codegen_flags: <defaults>
</compile_context>

<pallas_src>
import functools

import jax
import jax.numpy as jnp
from jax import lax
from jax.experimental import pallas as pl
from jax.experimental.pallas import tpu as pltpu


def _basic_block_kernel(x_ref, w1_ref, b1_ref, w2_ref, b2_ref, out_ref,
                        pad_in, pad_y1, *, HT, W, C):
    """Computes one (batch n, H-tile t) output block.

    x_ref:   (1, H, W, C) f32 — full image of batch n (block index constant
             across t, so it is DMA'd once per n); also the residual source.
    w*_ref:  (9C, C) bf16 — conv weights with BN scale folded, contraction
             over (kh, kw, ci).
    b*_ref:  (1, C) f32 — folded BN bias.
    out_ref: (1, HT, W, C) f32 — output rows [t*HT, t*HT+HT).
    pad_in:  (HT+4, W+2, C) bf16 scratch — zero-padded input slab with a
             2-row halo (conv1 must produce a 1-row halo for conv2).
    pad_y1:  (HT+2, W+2, C) bf16 scratch — zero-padded conv1 activation slab.
    """
    cdt = pad_in.dtype                      # bf16 MXU operand dtype
    t = pl.program_id(1)
    T = pl.num_programs(1)
    row0 = pl.multiple_of(t * HT, HT)       # first output row of this tile

    def conv3x3(pad_ref, w_ref, rows):
        # Fold all 9 taps into a single K = 9*C contraction: one MXU pass,
        # no VMEM accumulator (partials stay in vregs / MXU result buffer).
        xp = pad_ref[...]                                   # (rows+2, W+2, C)
        x9 = jnp.concatenate(
            [xp[kh:kh + rows, kw:kw + W, :]
             for kh in range(3) for kw in range(3)], axis=-1)   # (rows, W, 9C)
        return jnp.einsum('hwk,kd->hwd', x9, w_ref[...],
                          preferred_element_type=jnp.float32)   # (rows, W, C)

    # ---------------- zero-padded input slab with 2-row halo ---------------
    # W borders (cols 0 and W+1) zeroed every step (thin strips, cheap).
    pad_in[:, 0:1, :] = jnp.zeros((HT + 4, 1, C), cdt)
    pad_in[:, W + 1:W + 2, :] = jnp.zeros((HT + 4, 1, C), cdt)
    # core rows (always in range)
    pad_in[2:HT + 2, 1:W + 1, :] = x_ref[0, pl.ds(row0, HT), :, :].astype(cdt)

    @pl.when(t > 0)
    def _():  # top halo: 2 rows from the previous tile
        pad_in[0:2, 1:W + 1, :] = (
            x_ref[0, pl.ds(row0 - 2, 2), :, :].astype(cdt))

    @pl.when(t == 0)
    def _():  # image top: zero padding
        pad_in[0:2, 1:W + 1, :] = jnp.zeros((2, W, C), cdt)

    @pl.when(t < T - 1)
    def _():  # bottom halo: 2 rows from the next tile
        pad_in[HT + 2:HT + 4, 1:W + 1, :] = (
            x_ref[0, pl.ds(row0 + HT, 2), :, :].astype(cdt))

    @pl.when(t == T - 1)
    def _():  # image bottom: zero padding
        pad_in[HT + 2:HT + 4, 1:W + 1, :] = jnp.zeros((2, W, C), cdt)

    # ------------- conv1 (BN1 scale folded) -> +bias -> ReLU ----------------
    # Produces HT+2 rows (1-row halo for conv2).  Elementwise math stays f32.
    y1 = jnp.maximum(conv3x3(pad_in, w1_ref, HT + 2) + b1_ref[0], 0.0)

    # zero-padded conv1 activation slab for conv2
    pad_y1[:, 0:1, :] = jnp.zeros((HT + 2, 1, C), cdt)
    pad_y1[:, W + 1:W + 2, :] = jnp.zeros((HT + 2, 1, C), cdt)
    pad_y1[:, 1:W + 1, :] = y1.astype(cdt)

    @pl.when(t == 0)
    def _():  # conv2 sees ZERO above the image, not conv1(zero-padded x)
        pad_y1[0:1, :, :] = jnp.zeros((1, W + 2, C), cdt)

    @pl.when(t == T - 1)
    def _():
        pad_y1[HT + 1:HT + 2, :, :] = jnp.zeros((1, W + 2, C), cdt)

    # ------------- conv2 (BN2 scale folded) -> +bias -> +residual -> ReLU ---
    y2 = conv3x3(pad_y1, w2_ref, HT) + b2_ref[0]
    res = x_ref[0, pl.ds(row0, HT), :, :]            # f32 residual rows
    out_ref[0] = jnp.maximum(y2 + res, 0.0).astype(out_ref.dtype)


def _pick_h_tile(H):
    # Largest of {32,16,8} that divides H and yields >= 2 tiles; else whole H.
    for ht in (32, 16, 8):
        if H % ht == 0 and H // ht >= 2:
            return ht
    return H


def basic_block_pallas(x_nhwc, w1, g1, be1, m1, v1, w2, g2, be2, m2, v2,
                       eps=1e-5, h_tile=None):
    """x_nhwc: (N, H, W, C) f32.  Conv weights in PyTorch layout (Co, Ci, 3, 3)."""
    N, H, W, C = x_nhwc.shape
    assert w1.shape == (C, C, 3, 3) and w2.shape == (C, C, 3, 3), (
        "identity BasicBlock requires inplanes == planes, stride == 1")
    HT = _pick_h_tile(H) if h_tile is None else h_tile
    assert H % HT == 0
    T = H // HT

    # --- glue: fold BN (running stats); scale goes into the conv weights ---
    s1 = g1 / jnp.sqrt(v1 + eps)
    s2 = g2 / jnp.sqrt(v2 + eps)
    b1 = (be1 - m1 * s1).reshape(1, C).astype(jnp.float32)
    b2 = (be2 - m2 * s2).reshape(1, C).astype(jnp.float32)

    def pack(w_pt, s):
        # (Co,Ci,3,3) -> (kh,kw,ci,co) -> (9C, C); fold BN scale (per co),
        # then cast to bf16 for the MXU.
        w = jnp.transpose(w_pt, (2, 3, 1, 0)).reshape(9 * C, C)
        return (w * s[None, :]).astype(jnp.bfloat16)

    w1k = pack(w1, s1)
    w2k = pack(w2, s2)

    kernel = functools.partial(_basic_block_kernel, HT=HT, W=W, C=C)

    flops = 2 * 2 * 9 * C * C * H * W * N            # 2 convs, 2 flop/MAC
    bytes_accessed = (2 * N * H * W * C * 4          # f32 input + output
                      + 2 * 9 * C * C * 2            # bf16 weights
                      + 2 * 2 * C * 4)               # folded biases

    return pl.pallas_call(
        kernel,
        out_shape=jax.ShapeDtypeStruct((N, H, W, C), x_nhwc.dtype),
        grid=(N, T),
        in_specs=[
            # full image per batch element (fetched once per n, constant in t)
            pl.BlockSpec((1, H, W, C), lambda n, t: (n, 0, 0, 0)),
            pl.BlockSpec((9 * C, C), lambda n, t: (0, 0)),
            pl.BlockSpec((1, C), lambda n, t: (0, 0)),
            pl.BlockSpec((9 * C, C), lambda n, t: (0, 0)),
            pl.BlockSpec((1, C), lambda n, t: (0, 0)),
        ],
        out_specs=pl.BlockSpec((1, HT, W, C), lambda n, t: (n, t, 0, 0)),
        scratch_shapes=[
            pltpu.VMEM((HT + 4, W + 2, C), jnp.bfloat16),   # padded input slab
            pltpu.VMEM((HT + 2, W + 2, C), jnp.bfloat16),   # padded conv1 act
        ],
        compiler_params=pltpu.CompilerParams(
            dimension_semantics=("parallel", "parallel")),
        cost_estimate=pl.CostEstimate(
            flops=flops, transcendentals=0, bytes_accessed=bytes_accessed),
    )(x_nhwc, w1k, b1, w2k, b2)


def basic_block_reference(x_nhwc, w1, g1, be1, m1, v1, w2, g2, be2, m2, v2,
                          eps=1e-5, match_kernel_dtypes=False):
    """Pure-JAX reference.  match_kernel_dtypes=True mirrors the kernel's
    bf16-operand / f32-accumulate MXU math (BN scale folded pre-cast)."""
    s1 = g1 / jnp.sqrt(v1 + eps)
    s2 = g2 / jnp.sqrt(v2 + eps)
    b1 = be1 - m1 * s1
    b2 = be2 - m2 * s2

    def conv(x, w_pt, s):
        w_hwio = jnp.transpose(w_pt, (2, 3, 1, 0)) * s     # BN scale folded
        if match_kernel_dtypes:
            w_hwio = w_hwio.astype(jnp.bfloat16)
            x = x.astype(jnp.bfloat16)
        return lax.conv_general_dilated(
            x, w_hwio, window_strides=(1, 1), padding='SAME',
            dimension_numbers=('NHWC', 'HWIO', 'NHWC'),
            preferred_element_type=jnp.float32)

    y = jax.nn.relu(conv(x_nhwc, w1, s1) + b1)
    y = conv(y, w2, s2) + b2
    return jax.nn.relu(y + x_nhwc)


if __name__ == "__main__":
    # Small shapes: batch=2, inplanes=planes=8, spatial 16x16 (NCHW in PyTorch).
    # H=16 -> HT=8 -> 2 H-tiles per image (exercises first/last-tile halos).
    N, C, H, W = 2, 8, 16, 16
    key = jax.random.PRNGKey(0)
    ks = jax.random.split(key, 11)

    x_nchw = jax.random.normal(ks[0], (N, C, H, W), jnp.float32)
    w1 = jax.random.normal(ks[1], (C, C, 3, 3), jnp.float32) * 0.1
    w2 = jax.random.normal(ks[2], (C, C, 3, 3), jnp.float32) * 0.1
    g1 = 1.0 + 0.1 * jax.random.normal(ks[3], (C,), jnp.float32)
    be1 = 0.1 * jax.random.normal(ks[4], (C,), jnp.float32)
    m1 = 0.1 * jax.random.normal(ks[5], (C,), jnp.float32)
    v1 = jax.random.uniform(ks[6], (C,), jnp.float32, 0.5, 1.5)
    g2 = 1.0 + 0.1 * jax.random.normal(ks[7], (C,), jnp.float32)
    be2 = 0.1 * jax.random.normal(ks[8], (C,), jnp.float32)
    m2 = 0.1 * jax.random.normal(ks[9], (C,), jnp.float32)
    v2 = jax.random.uniform(ks[10], (C,), jnp.float32, 0.5, 1.5)

    # layout: NCHW (PyTorch) -> NHWC (kernel)
    x_nhwc = jnp.transpose(x_nchw, (0, 2, 3, 1))

    out = basic_block_pallas(x_nhwc, w1, g1, be1, m1, v1, w2, g2, be2, m2, v2)
    out = jax.block_until_ready(out)
    assert out.shape == (N, H, W, C)

    # 1) Tight check against a reference using the same bf16-operand /
    #    f32-accumulate / scale-folded conv math as the kernel's MXU path.
    ref_bf16 = jax.block_until_ready(basic_block_reference(
        x_nhwc, w1, g1, be1, m1, v1, w2, g2, be2, m2, v2,
        match_kernel_dtypes=True))
    assert jnp.allclose(out, ref_bf16, atol=5e-3, rtol=5e-3), \
        "mismatch vs bf16-compute reference"

    # 2) Looser check against the full-f32 reference.
    ref_f32 = jax.block_until_ready(basic_block_reference(
        x_nhwc, w1, g1, be1, m1, v1, w2, g2, be2, m2, v2,
        match_kernel_dtypes=False))
    assert jnp.allclose(out, ref_f32, atol=5e-2, rtol=5e-2), \
        "mismatch vs f32 reference"

    print("KERNEL_OK")
</pallas_src>

<mosaic_0001>
module attributes {stable_mosaic.version = 11 : i64} {
  func.func @_basic_block_kernel(%arg0: i32, %arg1: i32, %arg2: memref<1x16x16x8xf32, #tpu.memory_space<vmem>>, %arg3: memref<72x8xbf16, #tpu.memory_space<vmem>>, %arg4: memref<1x8xf32, #tpu.memory_space<vmem>>, %arg5: memref<72x8xbf16, #tpu.memory_space<vmem>>, %arg6: memref<1x8xf32, #tpu.memory_space<vmem>>, %arg7: memref<1x8x16x8xf32, #tpu.memory_space<vmem>>, %arg8: memref<12x18x8xbf16, #tpu.memory_space<vmem>>, %arg9: memref<10x18x8xbf16, #tpu.memory_space<vmem>>) attributes {dimension_semantics = [#tpu.dimension_semantics<parallel>, #tpu.dimension_semantics<parallel>], iteration_bounds = array<i64: 2, 2>, scalar_prefetch = 0 : i64, scratch_operands = 2 : i64, tpu.core_type = #tpu.core_type<tc>, window_params = [{transform_indices = @transform_0, window_bounds = array<i64: 1, 16, 16, 8>}, {pipeline_mode = #tpu.pipeline_mode<synchronous>, transform_indices = @transform_1, window_bounds = array<i64: 72, 8>}, {pipeline_mode = #tpu.pipeline_mode<synchronous>, transform_indices = @transform_2, window_bounds = array<i64: 1, 8>}, {pipeline_mode = #tpu.pipeline_mode<synchronous>, transform_indices = @transform_3, window_bounds = array<i64: 72, 8>}, {pipeline_mode = #tpu.pipeline_mode<synchronous>, transform_indices = @transform_4, window_bounds = array<i64: 1, 8>}, {transform_indices = @transform_5, window_bounds = array<i64: 1, 8, 16, 8>}]} {
    %c8_i32 = arith.constant 8 : i32
    %0 = arith.muli %arg1, %c8_i32 : i32
    %1 = tpu.assume_multiple %0, 8 : i32
    %cst = arith.constant 0.000000e+00 : bf16
    %2 = vector.broadcast %cst : bf16 to vector<12x1x8xbf16>
    %c0 = arith.constant 0 : index
    %c0_0 = arith.constant 0 : index
    %c0_1 = arith.constant 0 : index
    %3 = vector.load %arg8[%c0, %c0_0, %c0_1] : memref<12x18x8xbf16, #tpu.memory_space<vmem>>, vector<12x1x8xbf16>
    tpu.vector_store %arg8[%c0, %c0_0, %c0_1], %2 {strides = array<i32>} : memref<12x18x8xbf16, #tpu.memory_space<vmem>>, vector<12x1x8xbf16>,
    %cst_2 = arith.constant 0.000000e+00 : bf16
    %4 = vector.broadcast %cst_2 : bf16 to vector<12x1x8xbf16>
    %c0_3 = arith.constant 0 : index
    %c17 = arith.constant 17 : index
    %c0_4 = arith.constant 0 : index
    %5 = vector.load %arg8[%c0_3, %c17, %c0_4] : memref<12x18x8xbf16, #tpu.memory_space<vmem>>, vector<12x1x8xbf16>
    tpu.vector_store %arg8[%c0_3, %c17, %c0_4], %4 {strides = array<i32>} : memref<12x18x8xbf16, #tpu.memory_space<vmem>>, vector<12x1x8xbf16>,
    %c0_5 = arith.constant 0 : index
    %6 = arith.index_cast %1 : i32 to index
    %c0_6 = arith.constant 0 : index
    %c0_7 = arith.constant 0 : index
    %7 = vector.load %arg2[%c0_5, %6, %c0_6, %c0_7] : memref<1x16x16x8xf32, #tpu.memory_space<vmem>>, vector<1x8x16x8xf32>
    %8 = vector.shape_cast %7 : vector<1x8x16x8xf32> to vector<8x16x8xf32>
    %9 = arith.truncf %8 : vector<8x16x8xf32> to vector<8x16x8xbf16>
    %c2 = arith.constant 2 : index
    %c1 = arith.constant 1 : index
    %c0_8 = arith.constant 0 : index
    %10 = vector.load %arg8[%c2, %c1, %c0_8] : memref<12x18x8xbf16, #tpu.memory_space<vmem>>, vector<8x16x8xbf16>
    tpu.vector_store %arg8[%c2, %c1, %c0_8], %9 {strides = array<i32>} : memref<12x18x8xbf16, #tpu.memory_space<vmem>>, vector<8x16x8xbf16>,
    %c0_i32 = arith.constant 0 : i32
    %11 = arith.cmpi sgt, %arg1, %c0_i32 : i32
    %12 = arith.extui %11 : i1 to i32
    %c0_i32_9 = arith.constant 0 : i32
    %13 = arith.cmpi ne, %12, %c0_i32_9 : i32
    scf.if %13 {
      %c2_i32 = arith.constant 2 : i32
      %82 = arith.subi %1, %c2_i32 : i32
      %c0_55 = arith.constant 0 : index
      %83 = arith.index_cast %82 : i32 to index
      %c0_56 = arith.constant 0 : index
      %c0_57 = arith.constant 0 : index
      %84 = vector.load %arg2[%c0_55, %83, %c0_56, %c0_57] : memref<1x16x16x8xf32, #tpu.memory_space<vmem>>, vector<1x2x16x8xf32>
      %85 = vector.shape_cast %84 : vector<1x2x16x8xf32> to vector<2x16x8xf32>
      %86 = arith.truncf %85 : vector<2x16x8xf32> to vector<2x16x8xbf16>
      %c0_58 = arith.constant 0 : index
      %c1_59 = arith.constant 1 : index
      %c0_60 = arith.constant 0 : index
      %87 = vector.load %arg8[%c0_58, %c1_59, %c0_60] : memref<12x18x8xbf16, #tpu.memory_space<vmem>>, vector<2x16x8xbf16>
      tpu.vector_store %arg8[%c0_58, %c1_59, %c0_60], %86 {strides = array<i32>} : memref<12x18x8xbf16, #tpu.memory_space<vmem>>, vector<2x16x8xbf16>,
    } else {
    }
    %c0_i32_10 = arith.constant 0 : i32
    %14 = arith.cmpi eq, %arg1, %c0_i32_10 : i32
    %15 = arith.extui %14 : i1 to i32
    %c0_i32_11 = arith.constant 0 : i32
    %16 = arith.cmpi ne, %15, %c0_i32_11 : i32
    scf.if %16 {
      %cst_55 = arith.constant 0.000000e+00 : bf16
      %82 = vector.broadcast %cst_55 : bf16 to vector<2x16x8xbf16>
      %c0_56 = arith.constant 0 : index
      %c1_57 = arith.constant 1 : index
      %c0_58 = arith.constant 0 : index
      %83 = vector.load %arg8[%c0_56, %c1_57, %c0_58] : memref<12x18x8xbf16, #tpu.memory_space<vmem>>, vector<2x16x8xbf16>
      tpu.vector_store %arg8[%c0_56, %c1_57, %c0_58], %82 {strides = array<i32>} : memref<12x18x8xbf16, #tpu.memory_space<vmem>>, vector<2x16x8xbf16>,
    } else {
    }
    %c1_i32 = arith.constant 1 : i32
    %17 = arith.cmpi slt, %arg1, %c1_i32 : i32
    %18 = arith.extui %17 : i1 to i32
    %c0_i32_12 = arith.constant 0 : i32
    %19 = arith.cmpi ne, %18, %c0_i32_12 : i32
    scf.if %19 {
      %c8_i32_55 = arith.constant 8 : i32
      %82 = arith.addi %1, %c8_i32_55 : i32
      %c0_56 = arith.constant 0 : index
      %83 = arith.index_cast %82 : i32 to index
      %c0_57 = arith.constant 0 : index
      %c0_58 = arith.constant 0 : index
      %84 = vector.load %arg2[%c0_56, %83, %c0_57, %c0_58] : memref<1x16x16x8xf32, #tpu.memory_space<vmem>>, vector<1x2x16x8xf32>
      %85 = vector.shape_cast %84 : vector<1x2x16x8xf32> to vector<2x16x8xf32>
      %86 = arith.truncf %85 : vector<2x16x8xf32> to vector<2x16x8xbf16>
      %c10 = arith.constant 10 : index
      %c1_59 = arith.constant 1 : index
      %c0_60 = arith.constant 0 : index
      %87 = vector.load %arg8[%c10, %c1_59, %c0_60] : memref<12x18x8xbf16, #tpu.memory_space<vmem>>, vector<2x16x8xbf16>
      tpu.vector_store %arg8[%c10, %c1_59, %c0_60], %86 {strides = array<i32>} : memref<12x18x8xbf16, #tpu.memory_space<vmem>>, vector<2x16x8xbf16>,
    } else {
    }
    %c1_i32_13 = arith.constant 1 : i32
    %20 = arith.cmpi eq, %arg1, %c1_i32_13 : i32
    %21 = arith.extui %20 : i1 to i32
    %c0_i32_14 = arith.constant 0 : i32
    %22 = arith.cmpi ne, %21, %c0_i32_14 : i32
    scf.if %22 {
      %cst_55 = arith.constant 0.000000e+00 : bf16
      %82 = vector.broadcast %cst_55 : bf16 to vector<2x16x8xbf16>
      %c10 = arith.constant 10 : index
      %c1_56 = arith.constant 1 : index
      %c0_57 = arith.constant 0 : index
      %83 = vector.load %arg8[%c10, %c1_56, %c0_57] : memref<12x18x8xbf16, #tpu.memory_space<vmem>>, vector<2x16x8xbf16>
      tpu.vector_store %arg8[%c10, %c1_56, %c0_57], %82 {strides = array<i32>} : memref<12x18x8xbf16, #tpu.memory_space<vmem>>, vector<2x16x8xbf16>,
    } else {
    }
    %c0_15 = arith.constant 0 : index
    %c0_16 = arith.constant 0 : index
    %c0_17 = arith.constant 0 : index
    %23 = vector.load %arg8[%c0_15, %c0_16, %c0_17] : memref<12x18x8xbf16, #tpu.memory_space<vmem>>, vector<12x18x8xbf16>
    %24 = vector.extract_strided_slice %23 {offsets = [0, 0, 0], sizes = [10, 16, 8], strides = [1, 1, 1]} : vector<12x18x8xbf16> to vector<10x16x8xbf16>
    %25 = vector.extract_strided_slice %23 {offsets = [0, 1, 0], sizes = [10, 16, 8], strides = [1, 1, 1]} : vector<12x18x8xbf16> to vector<10x16x8xbf16>
    %26 = vector.extract_strided_slice %23 {offsets = [0, 2, 0], sizes = [10, 16, 8], strides = [1, 1, 1]} : vector<12x18x8xbf16> to vector<10x16x8xbf16>
    %27 = vector.extract_strided_slice %23 {offsets = [1, 0, 0], sizes = [10, 16, 8], strides = [1, 1, 1]} : vector<12x18x8xbf16> to vector<10x16x8xbf16>
    %28 = vector.extract_strided_slice %23 {offsets = [1, 1, 0], sizes = [10, 16, 8], strides = [1, 1, 1]} : vector<12x18x8xbf16> to vector<10x16x8xbf16>
    %29 = vector.extract_strided_slice %23 {offsets = [1, 2, 0], sizes = [10, 16, 8], strides = [1, 1, 1]} : vector<12x18x8xbf16> to vector<10x16x8xbf16>
    %30 = vector.extract_strided_slice %23 {offsets = [2, 0, 0], sizes = [10, 16, 8], strides = [1, 1, 1]} : vector<12x18x8xbf16> to vector<10x16x8xbf16>
    %31 = vector.extract_strided_slice %23 {offsets = [2, 1, 0], sizes = [10, 16, 8], strides = [1, 1, 1]} : vector<12x18x8xbf16> to vector<10x16x8xbf16>
    %32 = vector.extract_strided_slice %23 {offsets = [2, 2, 0], sizes = [10, 16, 8], strides = [1, 1, 1]} : vector<12x18x8xbf16> to vector<10x16x8xbf16>
    %33 = tpu.concatenate %24, %25, %26, %27, %28, %29, %30, %31, %32 in 2 : vector<10x16x8xbf16>, vector<10x16x8xbf16>, vector<10x16x8xbf16>, vector<10x16x8xbf16>, vector<10x16x8xbf16>, vector<10x16x8xbf16>, vector<10x16x8xbf16>, vector<10x16x8xbf16>, vector<10x16x8xbf16> -> vector<10x16x72xbf16>
    %c0_18 = arith.constant 0 : index
    %c0_19 = arith.constant 0 : index
    %34 = vector.load %arg3[%c0_18, %c0_19] : memref<72x8xbf16, #tpu.memory_space<vmem>>, vector<72x8xbf16>
    "tpu.trace_start"() <{level = 10 : i32, message = "hwk,kd->hwd"}> : () -> ()
    %cst_20 = arith.constant dense<0.000000e+00> : vector<10x16x8xf32>
    %35 = tpu.matmul %33, %34, %cst_20 {dimension_numbers = #tpu.dot_dimension_numbers<[2], [0], [0, 1], [1], [0, 0, 0, 1, 1, 1], [], []>} : vector<10x16x72xbf16>, vector<72x8xbf16>, vector<10x16x8xf32> -> vector<10x16x8xf32>
    "tpu.trace_stop"() : () -> ()
    %c0_21 = arith.constant 0 : index
    %c0_22 = arith.constant 0 : index
    %36 = vector.load %arg4[%c0_21, %c0_22] : memref<1x8xf32, #tpu.memory_space<vmem>>, vector<1x8xf32>
    %37 = vector.shape_cast %36 : vector<1x8xf32> to vector<8xf32>
    %38 = vector.shape_cast %37 : vector<8xf32> to vector<1x1x8xf32>
    %39 = vector.broadcast %38 : vector<1x1x8xf32> to vector<10x16x8xf32>
    %40 = arith.addf %35, %39 : vector<10x16x8xf32>
    %cst_23 = arith.constant 0.000000e+00 : f32
    %41 = vector.broadcast %cst_23 : f32 to vector<10x16x8xf32>
    %42 = arith.maximumf %40, %41 : vector<10x16x8xf32>
    %cst_24 = arith.constant 0.000000e+00 : bf16
    %43 = vector.broadcast %cst_24 : bf16 to vector<10x1x8xbf16>
    %c0_25 = arith.constant 0 : index
    %c0_26 = arith.constant 0 : index
    %c0_27 = arith.constant 0 : index
    %44 = vector.load %arg9[%c0_25, %c0_26, %c0_27] : memref<10x18x8xbf16, #tpu.memory_space<vmem>>, vector<10x1x8xbf16>
    tpu.vector_store %arg9[%c0_25, %c0_26, %c0_27], %43 {strides = array<i32>} : memref<10x18x8xbf16, #tpu.memory_space<vmem>>, vector<10x1x8xbf16>,
    %cst_28 = arith.constant 0.000000e+00 : bf16
    %45 = vector.broadcast %cst_28 : bf16 to vector<10x1x8xbf16>
    %c0_29 = arith.constant 0 : index
    %c17_30 = arith.constant 17 : index
    %c0_31 = arith.constant 0 : index
    %46 = vector.load %arg9[%c0_29, %c17_30, %c0_31] : memref<10x18x8xbf16, #tpu.memory_space<vmem>>, vector<10x1x8xbf16>
    tpu.vector_store %arg9[%c0_29, %c17_30, %c0_31], %45 {strides = array<i32>} : memref<10x18x8xbf16, #tpu.memory_space<vmem>>, vector<10x1x8xbf16>,
    %47 = arith.truncf %42 : vector<10x16x8xf32> to vector<10x16x8xbf16>
    %c0_32 = arith.constant 0 : index
    %c1_33 = arith.constant 1 : index
    %c0_34 = arith.constant 0 : index
    %48 = vector.load %arg9[%c0_32, %c1_33, %c0_34] : memref<10x18x8xbf16, #tpu.memory_space<vmem>>, vector<10x16x8xbf16>
    tpu.vector_store %arg9[%c0_32, %c1_33, %c0_34], %47 {strides = array<i32>} : memref<10x18x8xbf16, #tpu.memory_space<vmem>>, vector<10x16x8xbf16>,
    %c0_i32_35 = arith.constant 0 : i32
    %49 = arith.cmpi eq, %arg1, %c0_i32_35 : i32
    %50 = arith.extui %49 : i1 to i32
    %c0_i32_36 = arith.constant 0 : i32
    %51 = arith.cmpi ne, %50, %c0_i32_36 : i32
    scf.if %51 {
      %cst_55 = arith.constant 0.000000e+00 : bf16
      %82 = vector.broadcast %cst_55 : bf16 to vector<1x18x8xbf16>
      %c0_56 = arith.constant 0 : index
      %c0_57 = arith.constant 0 : index
      %c0_58 = arith.constant 0 : index
      %83 = vector.load %arg9[%c0_56, %c0_57, %c0_58] : memref<10x18x8xbf16, #tpu.memory_space<vmem>>, vector<1x18x8xbf16>
      tpu.vector_store %arg9[%c0_56, %c0_57, %c0_58], %82 {strides = array<i32>} : memref<10x18x8xbf16, #tpu.memory_space<vmem>>, vector<1x18x8xbf16>,
    } else {
    }
    %c1_i32_37 = arith.constant 1 : i32
    %52 = arith.cmpi eq, %arg1, %c1_i32_37 : i32
    %53 = arith.extui %52 : i1 to i32
    %c0_i32_38 = arith.constant 0 : i32
    %54 = arith.cmpi ne, %53, %c0_i32_38 : i32
    scf.if %54 {
      %cst_55 = arith.constant 0.000000e+00 : bf16
      %82 = vector.broadcast %cst_55 : bf16 to vector<1x18x8xbf16>
      %c9 = arith.constant 9 : index
      %c0_56 = arith.constant 0 : index
      %c0_57 = arith.constant 0 : index
      %83 = vector.load %arg9[%c9, %c0_56, %c0_57] : memref<10x18x8xbf16, #tpu.memory_space<vmem>>, vector<1x18x8xbf16>
      tpu.vector_store %arg9[%c9, %c0_56, %c0_57], %82 {strides = array<i32>} : memref<10x18x8xbf16, #tpu.memory_space<vmem>>, vector<1x18x8xbf16>,
    } else {
    }
    %c0_39 = arith.constant 0 : index
    %c0_40 = arith.constant 0 : index
    %c0_41 = arith.constant 0 : index
    %55 = vector.load %arg9[%c0_39, %c0_40, %c0_41] : memref<10x18x8xbf16, #tpu.memory_space<vmem>>, vector<10x18x8xbf16>
    %56 = vector.extract_strided_slice %55 {offsets = [0, 0, 0], sizes = [8, 16, 8], strides = [1, 1, 1]} : vector<10x18x8xbf16> to vector<8x16x8xbf16>
    %57 = vector.extract_strided_slice %55 {offsets = [0, 1, 0], sizes = [8, 16, 8], strides = [1, 1, 1]} : vector<10x18x8xbf16> to vector<8x16x8xbf16>
    %58 = vector.extract_strided_slice %55 {offsets = [0, 2, 0], sizes = [8, 16, 8], strides = [1, 1, 1]} : vector<10x18x8xbf16> to vector<8x16x8xbf16>
    %59 = vector.extract_strided_slice %55 {offsets = [1, 0, 0], sizes = [8, 16, 8], strides = [1, 1, 1]} : vector<10x18x8xbf16> to vector<8x16x8xbf16>
    %60 = vector.extract_strided_slice %55 {offsets = [1, 1, 0], sizes = [8, 16, 8], strides = [1, 1, 1]} : vector<10x18x8xbf16> to vector<8x16x8xbf16>
    %61 = vector.extract_strided_slice %55 {offsets = [1, 2, 0], sizes = [8, 16, 8], strides = [1, 1, 1]} : vector<10x18x8xbf16> to vector<8x16x8xbf16>
    %62 = vector.extract_strided_slice %55 {offsets = [2, 0, 0], sizes = [8, 16, 8], strides = [1, 1, 1]} : vector<10x18x8xbf16> to vector<8x16x8xbf16>
    %63 = vector.extract_strided_slice %55 {offsets = [2, 1, 0], sizes = [8, 16, 8], strides = [1, 1, 1]} : vector<10x18x8xbf16> to vector<8x16x8xbf16>
    %64 = vector.extract_strided_slice %55 {offsets = [2, 2, 0], sizes = [8, 16, 8], strides = [1, 1, 1]} : vector<10x18x8xbf16> to vector<8x16x8xbf16>
    %65 = tpu.concatenate %56, %57, %58, %59, %60, %61, %62, %63, %64 in 2 : vector<8x16x8xbf16>, vector<8x16x8xbf16>, vector<8x16x8xbf16>, vector<8x16x8xbf16>, vector<8x16x8xbf16>, vector<8x16x8xbf16>, vector<8x16x8xbf16>, vector<8x16x8xbf16>, vector<8x16x8xbf16> -> vector<8x16x72xbf16>
    %c0_42 = arith.constant 0 : index
    %c0_43 = arith.constant 0 : index
    %66 = vector.load %arg5[%c0_42, %c0_43] : memref<72x8xbf16, #tpu.memory_space<vmem>>, vector<72x8xbf16>
    "tpu.trace_start"() <{level = 10 : i32, message = "hwk,kd->hwd"}> : () -> ()
    %cst_44 = arith.constant dense<0.000000e+00> : vector<8x16x8xf32>
    %67 = tpu.matmul %65, %66, %cst_44 {dimension_numbers = #tpu.dot_dimension_numbers<[2], [0], [0, 1], [1], [0, 0, 0, 1, 1, 1], [], []>} : vector<8x16x72xbf16>, vector<72x8xbf16>, vector<8x16x8xf32> -> vector<8x16x8xf32>
    "tpu.trace_stop"() : () -> ()
    %c0_45 = arith.constant 0 : index
    %c0_46 = arith.constant 0 : index
    %68 = vector.load %arg6[%c0_45, %c0_46] : memref<1x8xf32, #tpu.memory_space<vmem>>, vector<1x8xf32>
    %69 = vector.shape_cast %68 : vector<1x8xf32> to vector<8xf32>
    %70 = vector.shape_cast %69 : vector<8xf32> to vector<1x1x8xf32>
    %71 = vector.broadcast %70 : vector<1x1x8xf32> to vector<8x16x8xf32>
    %72 = arith.addf %67, %71 : vector<8x16x8xf32>
    %c0_47 = arith.constant 0 : index
    %73 = arith.index_cast %1 : i32 to index
    %c0_48 = arith.constant 0 : index
    %c0_49 = arith.constant 0 : index
    %74 = vector.load %arg2[%c0_47, %73, %c0_48, %c0_49] : memref<1x16x16x8xf32, #tpu.memory_space<vmem>>, vector<1x8x16x8xf32>
    %75 = vector.shape_cast %74 : vector<1x8x16x8xf32> to vector<8x16x8xf32>
    %76 = arith.addf %72, %75 : vector<8x16x8xf32>
    %cst_50 = arith.constant 0.000000e+00 : f32
    %77 = vector.broadcast %cst_50 : f32 to vector<8x16x8xf32>
    %78 = arith.maximumf %76, %77 : vector<8x16x8xf32>
    %c0_51 = arith.constant 0 : index
    %c0_52 = arith.constant 0 : index
    %c0_53 = arith.constant 0 : index
    %c0_54 = arith.constant 0 : index
    %79 = vector.load %arg7[%c0_51, %c0_52, %c0_53, %c0_54] : memref<1x8x16x8xf32, #tpu.memory_space<vmem>>, vector<1x8x16x8xf32>
    %80 = vector.shape_cast %79 : vector<1x8x16x8xf32> to vector<8x16x8xf32>
    %81 = vector.shape_cast %78 : vector<8x16x8xf32> to vector<1x8x16x8xf32>
    tpu.vector_store %arg7[%c0_51, %c0_52, %c0_53, %c0_54], %81 {strides = array<i32>} : memref<1x8x16x8xf32, #tpu.memory_space<vmem>>, vector<1x8x16x8xf32>,
    return
  }
  func.func @transform_0(%arg0: i32, %arg1: i32) -> (i32, i32, i32, i32) {
    %c0_i32 = arith.constant 0 : i32
    %c0_i32_0 = arith.constant 0 : i32
    %c0_i32_1 = arith.constant 0 : i32
    %c0_i32_2 = arith.constant 0 : i32
    return %arg0, %c0_i32, %c0_i32_0, %c0_i32_1 : i32, i32, i32, i32
  }
  func.func @transform_1(%arg0: i32, %arg1: i32) -> (i32, i32) {
    %c0_i32 = arith.constant 0 : i32
    %c0_i32_0 = arith.constant 0 : i32
    %c0_i32_1 = arith.constant 0 : i32
    return %c0_i32, %c0_i32_0 : i32, i32
  }
  func.func @transform_2(%arg0: i32, %arg1: i32) -> (i32, i32) {
    %c0_i32 = arith.constant 0 : i32
    %c0_i32_0 = arith.constant 0 : i32
    %c0_i32_1 = arith.constant 0 : i32
    return %c0_i32, %c0_i32_0 : i32, i32
  }
  func.func @transform_3(%arg0: i32, %arg1: i32) -> (i32, i32) {
    %c0_i32 = arith.constant 0 : i32
    %c0_i32_0 = arith.constant 0 : i32
    %c0_i32_1 = arith.constant 0 : i32
    return %c0_i32, %c0_i32_0 : i32, i32
  }
  func.func @transform_4(%arg0: i32, %arg1: i32) -> (i32, i32) {
    %c0_i32 = arith.constant 0 : i32
    %c0_i32_0 = arith.constant 0 : i32
    %c0_i32_1 = arith.constant 0 : i32
    return %c0_i32, %c0_i32_0 : i32, i32
  }
  func.func @transform_5(%arg0: i32, %arg1: i32) -> (i32, i32, i32, i32) {
    %c0_i32 = arith.constant 0 : i32
    %c0_i32_0 = arith.constant 0 : i32
    %c0_i32_1 = arith.constant 0 : i32
    return %arg0, %arg1, %c0_i32, %c0_i32_0 : i32, i32, i32, i32
  }
}

</mosaic_0001>

<llo_original>
// kernel: tpu_custom_call.1
$region0: #{tpu_custom_call.1}
  #allocation0 [shape = 'u32[]', space=smem, size = 0x4, offset = 0x4, fixed_abs, tag = 'smem constant byte address 0x4 - core index']
  #allocation1 [shape = 'u32[72,128]{1,0:T(1,128)}', space=vmem, size = 0x9000, scoped, tag = 'internal scratch']
  #allocation2 [shape = 'bf16[12,18,8]{2,1,0:T(8,128)(2,1)}', space=vmem, size = 0x12000, scoped, tag = 'scratch operand']
  #allocation3 [shape = 'bf16[10,18,8]{2,1,0:T(8,128)(2,1)}', space=vmem, size = 0xf000, scoped, tag = 'scratch operand']
  %s0 = inlined_call_operand.vmem [shape: f32[2,16,16,8], index: 0, kind: input, shape index: {}]
  %s1 = inlined_call_operand.vmem [shape: bf16[72,8], index: 1, kind: input, shape index: {}]
  %s2 = inlined_call_operand.vmem [shape: f32[1,8], index: 2, kind: input, shape index: {}]
  %s3 = inlined_call_operand.vmem [shape: bf16[72,8], index: 3, kind: input, shape index: {}]
  %s4 = inlined_call_operand.vmem [shape: f32[1,8], index: 4, kind: input, shape index: {}]
  %s5 = inlined_call_operand.vmem [shape: f32[2,16,16,8], index: 5, kind: output, shape index: {}]
  %s6 = sld [smem:[#allocation0]]
  $region77: #{tpu_custom_call.1} parent=0
    _
  %s8 = ssub.s32 1, %s6
  %s9 = scalar_select 0, %s8, %s6
  loop: start=0, step=1, limit=6
  $region2: #{tpu_custom_call.1} parent=0 // loop_pre_header
    _
  $region3: #{tpu_custom_call.1} parent=0 // loop_header
    %s11 = sphi 0, %s15
    %p12 = scmp.ge.s32.totalorder %s11, 6
    %s18 = sphi 0, %s30
    %s19 = sphi 0, %s26
    %s20 = sphi 0, %s18
    %s21 = sphi 0, %s19
    %s22 = sphi 0, %s20
    %s23 = sphi 0, %s21
    %s33 = sphi 0, %s35
    %s36 = sphi 0, %s33
    %s37 = sphi 0, %s36
    %s53 = sphi 0, %s37
    %s57 = sphi 0, %s57
    %s59 = sphi 0, %s57
    %s60 = sphi 0, %s59
    %s74 = sphi 0, %s60
    %s78 = sphi 0, %s78
    %s80 = sphi 0, %s78
    %s81 = sphi 0, %s80
    %s95 = sphi 0, %s81
    %s99 = sphi 0, %s99
    %s101 = sphi 0, %s99
    %s102 = sphi 0, %s101
    %s116 = sphi 0, %s102
    %s120 = sphi 0, %s120
    %s122 = sphi 0, %s120
    %s123 = sphi 0, %s122
    %s137 = sphi 0, %s123
    %s145 = sphi 0, %s147
    %s148 = sphi 0, %s145
    %s149 = sphi 0, %s148
    %s165 = sphi 0, %s149
  $region4: #{tpu_custom_call.1} parent=0 // loop_header_branch
    %14 = sbr.rel (%p12) target = $region8
  $region5: #{tpu_custom_call.1} parent=0 // loop_body
    %s16 = ssub.s32 %s11, 1
    %s17 = ssub.s32 %s11, 2
    %s24 = sadd.s32 1, %s19
    %p25 = scmp.ge.s32.totalorder %s24, 2
    %s26 = scalar_select %p25, 0, %s24
    %s27 = sadd.s32 1, %s18
    %s28 = scalar_select %p25, %s27, %s18
    %p29 = scmp.ge.s32.totalorder %s28, 2
    %s30 = scalar_select %p29, 0, %s28
    %s31 = ssub.s32 %s18, %s30
    %p32 = scmp.eq.s32.totalorder %s31, 0
    %s34 = sadd.s32 %s33, 1
    %s35 = scalar_select %p32, %s33, %s34
    %p38 = pneg %p32
    %p39 = scmp.eq.s32.totalorder %s11, 3
    %p40 = por %p38, %p39
    %p41 = scmp.ne.s32.totalorder %s33, %s36
    %p42 = scmp.eq.s32.totalorder %s11, 0
    %p43 = por %p41, %p42
    %p44 = scmp.ne.s32.totalorder %s33, %s36
    %p45 = scmp.eq.s32.totalorder %s16, 3
    %p46 = por %p44, %p45
    %p47 = scmp.ne.s32.totalorder %s36, %s37
    %p48 = scmp.eq.s32.totalorder %s16, 0
    %p49 = por %p47, %p48
    %p50 = scmp.ne.s32.totalorder %s36, %s37
    %p51 = scmp.eq.s32.totalorder %s17, 3
    %p52 = por %p50, %p51
    %p54 = scmp.ne.s32.totalorder %s37, %s53
    %p55 = scmp.eq.s32.totalorder %s17, 0
    %p56 = por %p54, %p55
    %s58 = sadd.s32 %s57, 1
    %p61 = scmp.eq.s32.totalorder %s11, 3
    %p62 = scmp.ne.s32.totalorder %s57, %s59
    %p63 = scmp.eq.s32.totalorder %s11, 0
    %p64 = por %p62, %p63
    %p65 = scmp.ne.s32.totalorder %s57, %s59
    %p66 = scmp.eq.s32.totalorder %s16, 3
    %p67 = por %p65, %p66
    %p68 = scmp.ne.s32.totalorder %s59, %s60
    %p69 = scmp.eq.s32.totalorder %s16, 0
    %p70 = por %p68, %p69
    %p71 = scmp.ne.s32.totalorder %s59, %s60
    %p72 = scmp.eq.s32.totalorder %s17, 3
    %p73 = por %p71, %p72
    %p75 = scmp.ne.s32.totalorder %s60, %s74
    %p76 = scmp.eq.s32.totalorder %s17, 0
    %p77 = por %p75, %p76
    %s79 = sadd.s32 %s78, 1
    %p82 = scmp.eq.s32.totalorder %s11, 3
    %p83 = scmp.ne.s32.totalorder %s78, %s80
    %p84 = scmp.eq.s32.totalorder %s11, 0
    %p85 = por %p83, %p84
    %p86 = scmp.ne.s32.totalorder %s78, %s80
    %p87 = scmp.eq.s32.totalorder %s16, 3
    %p88 = por %p86, %p87
    %p89 = scmp.ne.s32.totalorder %s80, %s81
    %p90 = scmp.eq.s32.totalorder %s16, 0
    %p91 = por %p89, %p90
    %p92 = scmp.ne.s32.totalorder %s80, %s81
    %p93 = scmp.eq.s32.totalorder %s17, 3
    %p94 = por %p92, %p93
    %p96 = scmp.ne.s32.totalorder %s81, %s95
    %p97 = scmp.eq.s32.totalorder %s17, 0
    %p98 = por %p96, %p97
    %s100 = sadd.s32 %s99, 1
    %p103 = scmp.eq.s32.totalorder %s11, 3
    %p104 = scmp.ne.s32.totalorder %s99, %s101
    %p105 = scmp.eq.s32.totalorder %s11, 0
    %p106 = por %p104, %p105
    %p107 = scmp.ne.s32.totalorder %s99, %s101
    %p108 = scmp.eq.s32.totalorder %s16, 3
    %p109 = por %p107, %p108
    %p110 = scmp.ne.s32.totalorder %s101, %s102
    %p111 = scmp.eq.s32.totalorder %s16, 0
    %p112 = por %p110, %p111
    %p113 = scmp.ne.s32.totalorder %s101, %s102
    %p114 = scmp.eq.s32.totalorder %s17, 3
    %p115 = por %p113, %p114
    %p117 = scmp.ne.s32.totalorder %s102, %s116
    %p118 = scmp.eq.s32.totalorder %s17, 0
    %p119 = por %p117, %p118
    %s121 = sadd.s32 %s120, 1
    %p124 = scmp.eq.s32.totalorder %s11, 3
    %p125 = scmp.ne.s32.totalorder %s120, %s122
    %p126 = scmp.eq.s32.totalorder %s11, 0
    %p127 = por %p125, %p126
    %p128 = scmp.ne.s32.totalorder %s120, %s122
    %p129 = scmp.eq.s32.totalorder %s16, 3
    %p130 = por %p128, %p129
    %p131 = scmp.ne.s32.totalorder %s122, %s123
    %p132 = scmp.eq.s32.totalorder %s16, 0
    %p133 = por %p131, %p132
    %p134 = scmp.ne.s32.totalorder %s122, %s123
    %p135 = scmp.eq.s32.totalorder %s17, 3
    %p136 = por %p134, %p135
    %p138 = scmp.ne.s32.totalorder %s123, %s137
    %p139 = scmp.eq.s32.totalorder %s17, 0
    %p140 = por %p138, %p139
    %s141 = ssub.s32 %s18, %s30
    %s142 = ssub.s32 %s19, %s26
    %s143 = sor.u32 %s141, %s142
    %p144 = scmp.eq.s32.totalorder %s143, 0
    %s146 = sadd.s32 %s145, 1
    %s147 = scalar_select %p144, %s145, %s146
    %p150 = pneg %p144
    %p151 = scmp.eq.s32.totalorder %s11, 3
    %p152 = por %p150, %p151
    %p153 = scmp.ne.s32.totalorder %s145, %s148
    %p154 = scmp.eq.s32.totalorder %s11, 0
    %p155 = por %p153, %p154
    %p156 = scmp.ne.s32.totalorder %s145, %s148
    %p157 = scmp.eq.s32.totalorder %s16, 3
    %p158 = por %p156, %p157
    %p159 = scmp.ne.s32.totalorder %s148, %s149
    %p160 = scmp.eq.s32.totalorder %s16, 0
    %p161 = por %p159, %p160
    %p162 = scmp.ne.s32.totalorder %s148, %s149
    %p163 = scmp.eq.s32.totalorder %s17, 3
    %p164 = por %p162, %p163
    %p166 = scmp.ne.s32.totalorder %s149, %s165
    %p167 = scmp.eq.s32.totalorder %s17, 0
    %p168 = por %p166, %p167
    %p169 = scmp.le.s32.totalorder 1, %s11
    %p170 = scmp.lt.s32.totalorder %s11, 5
    %p171 = pnand %p169, %p170
    %p172 = pneg %p171
    // Predicated region
    $region9: #{tpu_custom_call.1} parent=5 // pred_check
      _
    $region10: #{tpu_custom_call.1} parent=5 // pred_check_branch
      %174 = sbr.rel (%p171) target = $region12
    $region11: #{tpu_custom_call.1} parent=5 // pred_region
      %s175 = ssub.s32 %s11, 1
      // Predicated region
      $region13: #{tpu_custom_call.1} parent=11 // pred_check
        %p176 = pneg %p70
      $region14: #{tpu_custom_call.1} parent=11 // pred_check_branch
        %178 = sbr.rel (%p176) target = $region16
      $region15: #{tpu_custom_call.1} parent=11 // pred_region
        _
      $region16: #{tpu_custom_call.1} parent=11 // pred_fallthru
        _
      // Predicated region
      $region17: #{tpu_custom_call.1} parent=11 // pred_check
        %p179 = pneg %p91
      $region18: #{tpu_custom_call.1} parent=11 // pred_check_branch
        %181 = sbr.rel (%p179) target = $region20
      $region19: #{tpu_custom_call.1} parent=11 // pred_region
        _
      $region20: #{tpu_custom_call.1} parent=11 // pred_fallthru
        _
      // Predicated region
      $region21: #{tpu_custom_call.1} parent=11 // pred_check
        %p182 = pneg %p112
      $region22: #{tpu_custom_call.1} parent=11 // pred_check_branch
        %184 = sbr.rel (%p182) target = $region24
      $region23: #{tpu_custom_call.1} parent=11 // pred_region
        _
      $region24: #{tpu_custom_call.1} parent=11 // pred_fallthru
        _
      // Predicated region
      $region25: #{tpu_custom_call.1} parent=11 // pred_check
        %p185 = pneg %p133
      $region26: #{tpu_custom_call.1} parent=11 // pred_check_branch
        %187 = sbr.rel (%p185) target = $region28
      $region27: #{tpu_custom_call.1} parent=11 // pred_region
        _
      $region28: #{tpu_custom_call.1} parent=11 // pred_fallthru
        _
    $region12: #{tpu_custom_call.1} parent=5 // pred_fallthru
      _
    %p188 = scmp.lt.s32.totalorder %s11, 4
    // Predicated region
    $region29: #{tpu_custom_call.1} parent=5 // pred_check
      %p189 = pneg %p188
    $region30: #{tpu_custom_call.1} parent=5 // pred_check_branch
      %191 = sbr.rel (%p189) target = $region32
    $region31: #{tpu_custom_call.1} parent=5 // pred_region
      // Predicated region
      $region33: #{tpu_custom_call.1} parent=31 // pred_check
        %p192 = pneg %p43
      $region34: #{tpu_custom_call.1} parent=31 // pred_check_branch
        %194 = sbr.rel (%p192) target = $region36
      $region35: #{tpu_custom_call.1} parent=31 // pred_region
        %p195 = scmp.lt.s32.totalorder %s18, 1
        %s196 = scalar_select %p195, %s18, 1
        %s197 = smul.addr %s196, 32
        %s198 = smul.addr %s197, 8
        %s199 = scalar_lea.vmem %s0, %s198
      $region36: #{tpu_custom_call.1} parent=31 // pred_fallthru
        _
    $region32: #{tpu_custom_call.1} parent=5 // pred_fallthru
      _
    %p200 = scmp.le.s32.totalorder 1, %s11
    %p201 = scmp.lt.s32.totalorder %s11, 5
    %p202 = pnand %p200, %p201
    %p203 = pneg %p202
    // Predicated region
    $region37: #{tpu_custom_call.1} parent=5 // pred_check
      _
    $region38: #{tpu_custom_call.1} parent=5 // pred_check_branch
      %205 = sbr.rel (%p202) target = $region40
    $region39: #{tpu_custom_call.1} parent=5 // pred_region
      %s206 = ssub.s32 %s11, 1
      %p207 = scmp.lt.s32.totalorder %s20, 1
      %s208 = scalar_select %p207, %s20, 1
      %s209 = smul.addr %s208, 32
      %s210 = smul.addr %s209, 8
      %s211 = scalar_lea.vmem %s0, %s210
      %p212 = pneg %p49
      %p213 = pneg %p46
      %p214 = pneg %p70
      %p215 = pneg %p67
      %p216 = pneg %p91
      %p217 = pneg %p88
      %p218 = pneg %p112
      %p219 = pneg %p109
      %p220 = pneg %p133
      %p221 = pneg %p130
      %p222 = pneg %p161
      %p223 = pneg %p158
      %s224 = smul.u32 8, %s21
      %p225 = scmp.lt.s32.totalorder %s20, 1
      %s226 = scalar_select %p225, %s20, 1
      %p227 = scmp.lt.s32.totalorder %s224, 15
      %s228 = scalar_select %p227, %s224, 15
      %s229 = smul.addr %s228, 2
      %s230 = smul.addr %s226, 32
      %s231 = sadd.s32 %s229, %s230
      %s232 = smul.addr %s231, 8
      %s233 = scalar_lea.vmem %s5, %s232
      %p234 = scmp.lt.s32.totalorder %s20, 1
      %s235 = scalar_select %p234, %s20, 1
      %s236 = smul.addr %s235, 32
      %s237 = smul.addr %s236, 8
      %s238 = scalar_lea.vmem %s0, %s237
      %s239 = smul.u32 8, %s21
      %p240 = scmp.lt.s32.totalorder %s20, 1
      %s241 = scalar_select %p240, %s20, 1
      %p242 = scmp.lt.s32.totalorder %s239, 15
      %s243 = scalar_select %p242, %s239, 15
      %s244 = smul.addr %s243, 2
      %s245 = smul.addr %s241, 32
      %s246 = sadd.s32 %s244, %s245
      %s247 = smul.addr %s246, 8
      %s248 = scalar_lea.vmem %s5, %s247
      %s249 = smul.u32 8, %s21
      %s251 = smul.u32 %s21, 8
      %vm252 = vcmask 57344
      %vm253 = vsmask.f32 256
      %vm254 = vmand %vm252, %vm253
      %v255 = vld [vmem:[#allocation2] sm:$0x1]
      %v256 = vsel %vm254, 0, %v255
      %257 = vst [vmem:[#allocation2] sm:$0x1] %v256
      %v258 = vld [vmem:[#allocation2 + $0xc] sm:$0x1]
      %v259 = vsel %vm254, 0, %v258
      %260 = vst [vmem:[#allocation2 + $0xc] sm:$0x1] %v259
      %v261 = vld [vmem:[#allocation2 + $0x18] sm:$0x1]
      %v262 = vsel %vm254, 0, %v261
      %263 = vst [vmem:[#allocation2 + $0x18] sm:$0x1] %v262
      %v264 = vld [vmem:[#allocation2 + $0x24] sm:$0x1]
      %v265 = vsel %vm254, 0, %v264
      %266 = vst [vmem:[#allocation2 + $0x24] sm:$0x1] %v265
      %v267 = vld [vmem:[#allocation2 + $0x30] sm:$0x1]
      %v268 = vsel %vm254, 0, %v267
      %269 = vst [vmem:[#allocation2 + $0x30] sm:$0x1] %v268
      %v270 = vld [vmem:[#allocation2 + $0x3c] sm:$0x1]
      %v271 = vsel %vm254, 0, %v270
      %272 = vst [vmem:[#allocation2 + $0x3c] sm:$0x1] %v271
      %v273 = vld [vmem:[#allocation2 + $0x48] sm:$0x1]
      %v274 = vsel %vm254, 0, %v273
      %275 = vst [vmem:[#allocation2 + $0x48] sm:$0x1] %v274
      %v276 = vld [vmem:[#allocation2 + $0x54] sm:$0x1]
      %v277 = vsel %vm254, 0, %v276
      %278 = vst [vmem:[#allocation2 + $0x54] sm:$0x1] %v277
      %v279 = vld [vmem:[#allocation2 + $0x60] sm:$0x1]
      %v280 = vsel %vm254, 0, %v279
      %281 = vst [vmem:[#allocation2 + $0x60] sm:$0x1] %v280
      %v282 = vld [vmem:[#allocation2 + $0x6c] sm:$0x1]
      %v283 = vsel %vm254, 0, %v282
      %284 = vst [vmem:[#allocation2 + $0x6c] sm:$0x1] %v283
      %v285 = vld [vmem:[#allocation2 + $0x78] sm:$0x1]
      %v286 = vsel %vm254, 0, %v285
      %287 = vst [vmem:[#allocation2 + $0x78] sm:$0x1] %v286
      %v288 = vld [vmem:[#allocation2 + $0x84] sm:$0x1]
      %v289 = vsel %vm254, 0, %v288
      %290 = vst [vmem:[#allocation2 + $0x84] sm:$0x1] %v289
      %vm291 = vsmask.f32 7938
      %vm292 = vmand %vm252, %vm291
      %v293 = vld [vmem:[#allocation2 + $0x8] sm:$0x1]
      %v294 = vsel %vm292, 0, %v293
      %295 = vst [vmem:[#allocation2 + $0x8] sm:$0x1] %v294
      %v296 = vld [vmem:[#allocation2 + $0x14] sm:$0x1]
      %v297 = vsel %vm292, 0, %v296
      %298 = vst [vmem:[#allocation2 + $0x14] sm:$0x1] %v297
      %v299 = vld [vmem:[#allocation2 + $0x20] sm:$0x1]
      %v300 = vsel %vm292, 0, %v299
      %301 = vst [vmem:[#allocation2 + $0x20] sm:$0x1] %v300
      %v302 = vld [vmem:[#allocation2 + $0x2c] sm:$0x1]
      %v303 = vsel %vm292, 0, %v302
      %304 = vst [vmem:[#allocation2 + $0x2c] sm:$0x1] %v303
      %v305 = vld [vmem:[#allocation2 + $0x38] sm:$0x1]
      %v306 = vsel %vm292, 0, %v305
      %307 = vst [vmem:[#allocation2 + $0x38] sm:$0x1] %v306
      %v308 = vld [vmem:[#allocation2 + $0x44] sm:$0x1]
      %v309 = vsel %vm292, 0, %v308
      %310 = vst [vmem:[#allocation2 + $0x44] sm:$0x1] %v309
      %v311 = vld [vmem:[#allocation2 + $0x50] sm:$0x1]
      %v312 = vsel %vm292, 0, %v311
      %313 = vst [vmem:[#allocation2 + $0x50] sm:$0x1] %v312
      %v314 = vld [vmem:[#allocation2 + $0x5c] sm:$0x1]
      %v315 = vsel %vm292, 0, %v314
      %316 = vst [vmem:[#allocation2 + $0x5c] sm:$0x1] %v315
      %v317 = vld [vmem:[#allocation2 + $0x68] sm:$0x1]
      %v318 = vsel %vm292, 0, %v317
      %319 = vst [vmem:[#allocation2 + $0x68] sm:$0x1] %v318
      %v320 = vld [vmem:[#allocation2 + $0x74] sm:$0x1]
      %v321 = vsel %vm292, 0, %v320
      %322 = vst [vmem:[#allocation2 + $0x74] sm:$0x1] %v321
      %v323 = vld [vmem:[#allocation2 + $0x80] sm:$0x1]
      %v324 = vsel %vm292, 0, %v323
      %325 = vst [vmem:[#allocation2 + $0x80] sm:$0x1] %v324
      %v326 = vld [vmem:[#allocation2 + $0x8c] sm:$0x1]
      %v327 = vsel %vm292, 0, %v326
      %328 = vst [vmem:[#allocation2 + $0x8c] sm:$0x1] %v327
      %s329 = smul.u32 %s251, 16
      %s330 = scalar_lea.vmem %s238, %s329
      %v331 = vld [vmem:[%s330] sm:$0xff]
      %v332 = vld [vmem:[%s330 + $0x8] sm:$0xff]
      %v333 = vld [vmem:[%s330 + $0x10] sm:$0xff]
      %v334 = vld [vmem:[%s330 + $0x18] sm:$0xff]
      %v335 = vld [vmem:[%s330 + $0x20] sm:$0xff]
      %v336 = vld [vmem:[%s330 + $0x28] sm:$0xff]
      %v337 = vld [vmem:[%s330 + $0x30] sm:$0xff]
      %v338 = vld [vmem:[%s330 + $0x38] sm:$0xff]
      %v339 = vld [vmem:[%s330 + $0x40] sm:$0xff]
      %v340 = vld [vmem:[%s330 + $0x48] sm:$0xff]
      %v341 = vld [vmem:[%s330 + $0x50] sm:$0xff]
      %v342 = vld [vmem:[%s330 + $0x58] sm:$0xff]
      %v343 = vld [vmem:[%s330 + $0x60] sm:$0xff]
      %v344 = vld [vmem:[%s330 + $0x68] sm:$0xff]
      %v345 = vld [vmem:[%s330 + $0x70] sm:$0xff]
      %v346 = vld [vmem:[%s330 + $0x78] sm:$0xff]
      %v347 = vpack.c.bf16 %v331, %v331
      %v348 = vpack.c.bf16 %v332, %v332
      %v349 = vpack.c.bf16 %v333, %v333
      %v350 = vpack.c.bf16 %v334, %v334
      %v351 = vpack.c.bf16 %v335, %v335
      %v352 = vpack.c.bf16 %v336, %v336
      %v353 = vpack.c.bf16 %v337, %v337
      %v354 = vpack.c.bf16 %v338, %v338
      %v355 = vpack.c.bf16 %v339, %v339
      %v356 = vpack.c.bf16 %v340, %v340
      %v357 = vpack.c.bf16 %v341, %v341
      %v358 = vpack.c.bf16 %v342, %v342
      %v359 = vpack.c.bf16 %v343, %v343
      %v360 = vpack.c.bf16 %v344, %v344
      %v361 = vpack.c.bf16 %v345, %v345
      %v362 = vpack.c.bf16 %v346, %v346
      %vm363 = vsmask.f32 4368
      %vm364 = vmor %vm253, %vm363
      %v366 = vshrl.u32 %v347, 16
      %v368 = vrot.slane %v366, 7
      %v369 = vshll.u32 %v347, 16
      %v371 = vor.u32 %v368, %v369
      %v372 = vrot.slane %v368, 4
      %v374 = vshrl.u32 %v348, 16
      %v376 = vrot.slane %v374, 7
      %v377 = vshll.u32 %v348, 16
      %v379 = vor.u32 %v376, %v377
      %v380 = vsel %vm364, %v372, %v379
      %v381 = vrot.slane %v376, 4
      %v383 = vshrl.u32 %v349, 16
      %v385 = vrot.slane %v383, 7
      %v386 = vshll.u32 %v349, 16
      %v388 = vor.u32 %v385, %v386
      %v389 = vrot.slane %v385, 4
      %v391 = vshrl.u32 %v350, 16
      %v393 = vrot.slane %v391, 7
      %v394 = vshll.u32 %v350, 16
      %v396 = vor.u32 %v393, %v394
      %v397 = vsel %vm364, %v389, %v396
      %v398 = vrot.slane %v393, 4
      %v400 = vshrl.u32 %v351, 16
      %v402 = vrot.slane %v400, 7
      %v403 = vshll.u32 %v351, 16
      %v405 = vor.u32 %v402, %v403
      %v406 = vrot.slane %v402, 4
      %v408 = vshrl.u32 %v352, 16
      %v410 = vrot.slane %v408, 7
      %v411 = vshll.u32 %v352, 16
      %v413 = vor.u32 %v410, %v411
      %v414 = vsel %vm364, %v406, %v413
      %v415 = vrot.slane %v410, 4
      %v417 = vshrl.u32 %v353, 16
      %v419 = vrot.slane %v417, 7
      %v420 = vshll.u32 %v353, 16
      %v422 = vor.u32 %v419, %v420
      %v423 = vrot.slane %v419, 4
      %v425 = vshrl.u32 %v354, 16
      %v427 = vrot.slane %v425, 7
      %v428 = vshll.u32 %v354, 16
      %v430 = vor.u32 %v427, %v428
      %v431 = vsel %vm364, %v423, %v430
      %v432 = vrot.slane %v427, 4
      %v434 = vshrl.u32 %v355, 16
      %v436 = vrot.slane %v434, 7
      %v437 = vshll.u32 %v355, 16
      %v439 = vor.u32 %v436, %v437
      %v440 = vrot.slane %v436, 4
      %v442 = vshrl.u32 %v356, 16
      %v444 = vrot.slane %v442, 7
      %v445 = vshll.u32 %v356, 16
      %v447 = vor.u32 %v444, %v445
      %v448 = vsel %vm364, %v440, %v447
      %v449 = vrot.slane %v444, 4
      %v451 = vshrl.u32 %v357, 16
      %v453 = vrot.slane %v451, 7
      %v454 = vshll.u32 %v357, 16
      %v456 = vor.u32 %v453, %v454
      %v457 = vrot.slane %v453, 4
      %v459 = vshrl.u32 %v358, 16
      %v461 = vrot.slane %v459, 7
      %v462 = vshll.u32 %v358, 16
      %v464 = vor.u32 %v461, %v462
      %v465 = vsel %vm364, %v457, %v464
      %v466 = vrot.slane %v461, 4
      %v468 = vshrl.u32 %v359, 16
      %v470 = vrot.slane %v468, 7
      %v471 = vshll.u32 %v359, 16
      %v473 = vor.u32 %v470, %v471
      %v474 = vrot.slane %v470, 4
      %v476 = vshrl.u32 %v360, 16
      %v478 = vrot.slane %v476, 7
      %v479 = vshll.u32 %v360, 16
      %v481 = vor.u32 %v478, %v479
      %v482 = vsel %vm364, %v474, %v481
      %v483 = vrot.slane %v478, 4
      %v485 = vshrl.u32 %v361, 16
      %v487 = vrot.slane %v485, 7
      %v488 = vshll.u32 %v361, 16
      %v490 = vor.u32 %v487, %v488
      %v491 = vrot.slane %v487, 4
      %v493 = vshrl.u32 %v362, 16
      %v495 = vrot.slane %v493, 7
      %v496 = vshll.u32 %v362, 16
      %v498 = vor.u32 %v495, %v496
      %v499 = vsel %vm364, %v491, %v498
      %v500 = vrot.slane %v495, 4
      %s525 = scalar_lea.vmem [#allocation2], 24
      %vm526 = vcmask 60416
      %vm527 = vmand %vm526, %vm291
      %v528 = vld [vmem:[%s525] sm:$0xf]
      %v529 = vsel %vm527, %v371, %v528
      %530 = vst [vmem:[%s525] sm:$0xf] %v529
      %vm531 = vcmask 60416
      %532 = vst.msk [vmem:[%s525 + $0x4] sm:$0xf] %vm531, %v380
      %v533 = vld [vmem:[%s525 + $0x8] sm:$0x1]
      %v534 = vsel %vm254, %v381, %v533
      %535 = vst [vmem:[%s525 + $0x8] sm:$0x1] %v534
      %v536 = vld [vmem:[%s525 + $0xc] sm:$0xf]
      %v537 = vsel %vm527, %v388, %v536
      %538 = vst [vmem:[%s525 + $0xc] sm:$0xf] %v537
      %539 = vst.msk [vmem:[%s525 + $0x10] sm:$0xf] %vm531, %v397
      %v540 = vld [vmem:[%s525 + $0x14] sm:$0x1]
      %v541 = vsel %vm254, %v398, %v540
      %542 = vst [vmem:[%s525 + $0x14] sm:$0x1] %v541
      %v543 = vld [vmem:[%s525 + $0x18] sm:$0xf]
      %v544 = vsel %vm527, %v405, %v543
      %545 = vst [vmem:[%s525 + $0x18] sm:$0xf] %v544
      %546 = vst.msk [vmem:[%s525 + $0x1c] sm:$0xf] %vm531, %v414
      %v547 = vld [vmem:[%s525 + $0x20] sm:$0x1]
      %v548 = vsel %vm254, %v415, %v547
      %549 = vst [vmem:[%s525 + $0x20] sm:$0x1] %v548
      %v550 = vld [vmem:[%s525 + $0x24] sm:$0xf]
      %v551 = vsel %vm527, %v422, %v550
      %552 = vst [vmem:[%s525 + $0x24] sm:$0xf] %v551
      %553 = vst.msk [vmem:[%s525 + $0x28] sm:$0xf] %vm531, %v431
      %v554 = vld [vmem:[%s525 + $0x2c] sm:$0x1]
      %v555 = vsel %vm254, %v432, %v554
      %556 = vst [vmem:[%s525 + $0x2c] sm:$0x1] %v555
      %v557 = vld [vmem:[%s525 + $0x30] sm:$0xf]
      %v558 = vsel %vm527, %v439, %v557
      %559 = vst [vmem:[%s525 + $0x30] sm:$0xf] %v558
      %560 = vst.msk [vmem:[%s525 + $0x34] sm:$0xf] %vm531, %v448
      %v561 = vld [vmem:[%s525 + $0x38] sm:$0x1]
      %v562 = vsel %vm254, %v449, %v561
      %563 = vst [vmem:[%s525 + $0x38] sm:$0x1] %v562
      %v564 = vld [vmem:[%s525 + $0x3c] sm:$0xf]
      %v565 = vsel %vm527, %v456, %v564
      %566 = vst [vmem:[%s525 + $0x3c] sm:$0xf] %v565
      %567 = vst.msk [vmem:[%s525 + $0x40] sm:$0xf] %vm531, %v465
      %v568 = vld [vmem:[%s525 + $0x44] sm:$0x1]
      %v569 = vsel %vm254, %v466, %v568
      %570 = vst [vmem:[%s525 + $0x44] sm:$0x1] %v569
      %v571 = vld [vmem:[%s525 + $0x48] sm:$0xf]
      %v572 = vsel %vm527, %v473, %v571
      %573 = vst [vmem:[%s525 + $0x48] sm:$0xf] %v572
      %574 = vst.msk [vmem:[%s525 + $0x4c] sm:$0xf] %vm531, %v482
      %v575 = vld [vmem:[%s525 + $0x50] sm:$0x1]
      %v576 = vsel %vm254, %v483, %v575
      %577 = vst [vmem:[%s525 + $0x50] sm:$0x1] %v576
      %v578 = vld [vmem:[%s525 + $0x54] sm:$0xf]
      %v579 = vsel %vm527, %v490, %v578
      %580 = vst [vmem:[%s525 + $0x54] sm:$0xf] %v579
      %581 = vst.msk [vmem:[%s525 + $0x58] sm:$0xf] %vm531, %v499
      %v582 = vld [vmem:[%s525 + $0x5c] sm:$0x1]
      %v583 = vsel %vm254, %v500, %v582
      %584 = vst [vmem:[%s525 + $0x5c] sm:$0x1] %v583
      %p585 = scmp.gt.s32.totalorder %s21, 0
      // Predicated region
      $region41: #{tpu_custom_call.1} parent=39 // pred_check
        %p586 = pneg %p585
      $region42: #{tpu_custom_call.1} parent=39 // pred_check_branch
        %588 = sbr.rel (%p586) target = $region44
      $region43: #{tpu_custom_call.1} parent=39 // pred_region
        %s589 = ssub.s32 %s251, 2
        %s590 = smul.u32 %s589, 16
        %s591 = scalar_lea.vmem %s238, %s590
        %v592 = vld [vmem:[%s591] sm:$0xff]
        %v593 = vld [vmem:[%s591 + $0x8] sm:$0xff]
        %v594 = vld [vmem:[%s591 + $0x10] sm:$0xff]
        %v595 = vld [vmem:[%s591 + $0x18] sm:$0xff]
        %v596 = vpack.c.bf16 %v592, %v592
        %v597 = vpack.c.bf16 %v593, %v593
        %v598 = vpack.c.bf16 %v594, %v594
        %v599 = vpack.c.bf16 %v595, %v595
        %v601 = vshrl.u32 %v596, 16
        %v603 = vrot.slane %v601, 7
        %v604 = vshll.u32 %v596, 16
        %v606 = vor.u32 %v603, %v604
        %v607 = vrot.slane %v603, 4
        %v609 = vshrl.u32 %v597, 16
        %v611 = vrot.slane %v609, 7
        %v612 = vshll.u32 %v597, 16
        %v614 = vor.u32 %v611, %v612
        %v615 = vsel %vm364, %v607, %v614
        %v616 = vrot.slane %v611, 4
        %v618 = vshrl.u32 %v598, 16
        %v620 = vrot.slane %v618, 7
        %v621 = vshll.u32 %v598, 16
        %v623 = vor.u32 %v620, %v621
        %v624 = vrot.slane %v620, 4
        %v626 = vshrl.u32 %v599, 16
        %v628 = vrot.slane %v626, 7
        %v629 = vshll.u32 %v599, 16
        %v631 = vor.u32 %v628, %v629
        %v632 = vsel %vm364, %v624, %v631
        %v633 = vrot.slane %v628, 4
        %v640 = vld [vmem:[#allocation2] sm:$0xf]
        %v641 = vsel %vm527, %v606, %v640
        %642 = vst [vmem:[#allocation2] sm:$0xf] %v641
        %643 = vst.msk [vmem:[#allocation2 + $0x4] sm:$0xf] %vm531, %v615
        %v644 = vld [vmem:[#allocation2 + $0x8] sm:$0x1]
        %v645 = vsel %vm254, %v616, %v644
        %646 = vst [vmem:[#allocation2 + $0x8] sm:$0x1] %v645
        %v647 = vld [vmem:[#allocation2 + $0xc] sm:$0xf]
        %v648 = vsel %vm527, %v623, %v647
        %649 = vst [vmem:[#allocation2 + $0xc] sm:$0xf] %v648
        %650 = vst.msk [vmem:[#allocation2 + $0x10] sm:$0xf] %vm531, %v632
        %v651 = vld [vmem:[#allocation2 + $0x14] sm:$0x1]
        %v652 = vsel %vm254, %v633, %v651
        %653 = vst [vmem:[#allocation2 + $0x14] sm:$0x1] %v652
      $region44: #{tpu_custom_call.1} parent=39 // pred_fallthru
        _
      %p654 = scmp.eq.s32.totalorder %s21, 0
      // Predicated region
      $region45: #{tpu_custom_call.1} parent=39 // pred_check
        %p655 = pneg %p654
      $region46: #{tpu_custom_call.1} parent=39 // pred_check_branch
        %657 = sbr.rel (%p655) target = $region48
      $region47: #{tpu_custom_call.1} parent=39 // pred_region
        %v658 = vld [vmem:[#allocation2] sm:$0xf]
        %v659 = vsel %vm527, 0, %v658
        %660 = vst [vmem:[#allocation2] sm:$0xf] %v659
        %661 = vst.msk [vmem:[#allocation2 + $0x4] sm:$0xf] %vm531, 0
        %v662 = vld [vmem:[#allocation2 + $0x8] sm:$0x1]
        %v663 = vsel %vm254, 0, %v662
        %664 = vst [vmem:[#allocation2 + $0x8] sm:$0x1] %v663
        %v665 = vld [vmem:[#allocation2 + $0xc] sm:$0xf]
        %v666 = vsel %vm527, 0, %v665
        %667 = vst [vmem:[#allocation2 + $0xc] sm:$0xf] %v666
        %668 = vst.msk [vmem:[#allocation2 + $0x10] sm:$0xf] %vm531, 0
        %v669 = vld [vmem:[#allocation2 + $0x14] sm:$0x1]
        %v670 = vsel %vm254, 0, %v669
        %671 = vst [vmem:[#allocation2 + $0x14] sm:$0x1] %v670
      $region48: #{tpu_custom_call.1} parent=39 // pred_fallthru
        _
      %p672 = scmp.lt.s32.totalorder %s21, 1
      // Predicated region
      $region49: #{tpu_custom_call.1} parent=39 // pred_check
        %p673 = pneg %p672
      $region50: #{tpu_custom_call.1} parent=39 // pred_check_branch
        %675 = sbr.rel (%p673) target = $region52
      $region51: #{tpu_custom_call.1} parent=39 // pred_region
        %s676 = sadd.s32 %s251, 8
        %s677 = smul.u32 %s676, 16
        %s678 = scalar_lea.vmem %s238, %s677
        %v679 = vld [vmem:[%s678] sm:$0xff]
        %v680 = vld [vmem:[%s678 + $0x8] sm:$0xff]
        %v681 = vld [vmem:[%s678 + $0x10] sm:$0xff]
        %v682 = vld [vmem:[%s678 + $0x18] sm:$0xff]
        %v683 = vpack.c.bf16 %v679, %v679
        %v684 = vpack.c.bf16 %v680, %v680
        %v685 = vpack.c.bf16 %v681, %v681
        %v686 = vpack.c.bf16 %v682, %v682
        %v688 = vshrl.u32 %v683, 16
        %v690 = vrot.slane %v688, 7
        %v691 = vshll.u32 %v683, 16
        %v693 = vor.u32 %v690, %v691
        %v694 = vrot.slane %v690, 4
        %v696 = vshrl.u32 %v684, 16
        %v698 = vrot.slane %v696, 7
        %v699 = vshll.u32 %v684, 16
        %v701 = vor.u32 %v698, %v699
        %v702 = vsel %vm364, %v694, %v701
        %v703 = vrot.slane %v698, 4
        %v705 = vshrl.u32 %v685, 16
        %v707 = vrot.slane %v705, 7
        %v708 = vshll.u32 %v685, 16
        %v710 = vor.u32 %v707, %v708
        %v711 = vrot.slane %v707, 4
        %v713 = vshrl.u32 %v686, 16
        %v715 = vrot.slane %v713, 7
        %v716 = vshll.u32 %v686, 16
        %v718 = vor.u32 %v715, %v716
        %v719 = vsel %vm364, %v711, %v718
        %v720 = vrot.slane %v715, 4
        %s727 = scalar_lea.vmem [#allocation2], 120
        %v728 = vld [vmem:[%s727] sm:$0xf]
        %v729 = vsel %vm527, %v693, %v728
        %730 = vst [vmem:[%s727] sm:$0xf] %v729
        %731 = vst.msk [vmem:[%s727 + $0x4] sm:$0xf] %vm531, %v702
        %v732 = vld [vmem:[%s727 + $0x8] sm:$0x1]
        %v733 = vsel %vm254, %v703, %v732
        %734 = vst [vmem:[%s727 + $0x8] sm:$0x1] %v733
        %v735 = vld [vmem:[%s727 + $0xc] sm:$0xf]
        %v736 = vsel %vm527, %v710, %v735
        %737 = vst [vmem:[%s727 + $0xc] sm:$0xf] %v736
        %738 = vst.msk [vmem:[%s727 + $0x10] sm:$0xf] %vm531, %v719
        %v739 = vld [vmem:[%s727 + $0x14] sm:$0x1]
        %v740 = vsel %vm254, %v720, %v739
        %741 = vst [vmem:[%s727 + $0x14] sm:$0x1] %v740
      $region52: #{tpu_custom_call.1} parent=39 // pred_fallthru
        _
      %p742 = scmp.eq.s32.totalorder %s21, 1
      // Predicated region
      $region53: #{tpu_custom_call.1} parent=39 // pred_check
        %p743 = pneg %p742
      $region54: #{tpu_custom_call.1} parent=39 // pred_check_branch
        %745 = sbr.rel (%p743) target = $region56
      $region55: #{tpu_custom_call.1} parent=39 // pred_region
        %s746 = scalar_lea.vmem [#allocation2], 120
        %v747 = vld [vmem:[%s746] sm:$0xf]
        %v748 = vsel %vm527, 0, %v747
        %749 = vst [vmem:[%s746] sm:$0xf] %v748
        %750 = vst.msk [vmem:[%s746 + $0x4] sm:$0xf] %vm531, 0
        %v751 = vld [vmem:[%s746 + $0x8] sm:$0x1]
        %v752 = vsel %vm254, 0, %v751
        %753 = vst [vmem:[%s746 + $0x8] sm:$0x1] %v752
        %v754 = vld [vmem:[%s746 + $0xc] sm:$0xf]
        %v755 = vsel %vm527, 0, %v754
        %756 = vst [vmem:[%s746 + $0xc] sm:$0xf] %v755
        %757 = vst.msk [vmem:[%s746 + $0x10] sm:$0xf] %vm531, 0
        %v758 = vld [vmem:[%s746 + $0x14] sm:$0x1]
        %v759 = vsel %vm254, 0, %v758
        %760 = vst [vmem:[%s746 + $0x14] sm:$0x1] %v759
      $region56: #{tpu_custom_call.1} parent=39 // pred_fallthru
        _
      %v761 = vld [vmem:[#allocation2] sm:$0xf]
      %v762 = vld [vmem:[#allocation2 + $0x4] sm:$0xf]
      %v763 = vld [vmem:[#allocation2 + $0x8] sm:$0x1]
      %v764 = vld [vmem:[#allocation2 + $0xc] sm:$0xf]
      %v765 = vld [vmem:[#allocation2 + $0x10] sm:$0xf]
      %v766 = vld [vmem:[#allocation2 + $0x14] sm:$0x1]
      %v767 = vld [vmem:[#allocation2 + $0x18] sm:$0xf]
      %v768 = vld [vmem:[#allocation2 + $0x1c] sm:$0xf]
      %v769 = vld [vmem:[#allocation2 + $0x20] sm:$0x1]
      %v770 = vld [vmem:[#allocation2 + $0x24] sm:$0xf]
      %v771 = vld [vmem:[#allocation2 + $0x28] sm:$0xf]
      %v772 = vld [vmem:[#allocation2 + $0x2c] sm:$0x1]
      %v773 = vld [vmem:[#allocation2 + $0x30] sm:$0xf]
      %v774 = vld [vmem:[#allocation2 + $0x34] sm:$0xf]
      %v775 = vld [vmem:[#allocation2 + $0x38] sm:$0x1]
      %v776 = vld [vmem:[#allocation2 + $0x3c] sm:$0xf]
      %v777 = vld [vmem:[#allocation2 + $0x40] sm:$0xf]
      %v778 = vld [vmem:[#allocation2 + $0x44] sm:$0x1]
      %v779 = vld [vmem:[#allocation2 + $0x48] sm:$0xf]
      %v780 = vld [vmem:[#allocation2 + $0x4c] sm:$0xf]
      %v781 = vld [vmem:[#allocation2 + $0x50] sm:$0x1]
      %v782 = vld [vmem:[#allocation2 + $0x54] sm:$0xf]
      %v783 = vld [vmem:[#allocation2 + $0x58] sm:$0xf]
      %v784 = vld [vmem:[#allocation2 + $0x5c] sm:$0x1]
      %v785 = vld [vmem:[#allocation2 + $0x60] sm:$0xf]
      %v786 = vld [vmem:[#allocation2 + $0x64] sm:$0xf]
      %v787 = vld [vmem:[#allocation2 + $0x68] sm:$0x1]
      %v788 = vld [vmem:[#allocation2 + $0x6c] sm:$0xf]
      %v789 = vld [vmem:[#allocation2 + $0x70] sm:$0xf]
      %v790 = vld [vmem:[#allocation2 + $0x74] sm:$0x1]
      %v791 = vld [vmem:[#allocation2 + $0x78] sm:$0xf]
      %v792 = vld [vmem:[#allocation2 + $0x7c] sm:$0xf]
      %v793 = vld [vmem:[#allocation2 + $0x80] sm:$0x1]
      %v794 = vld [vmem:[#allocation2 + $0x84] sm:$0xf]
      %v795 = vld [vmem:[#allocation2 + $0x88] sm:$0xf]
      %v796 = vld [vmem:[#allocation2 + $0x8c] sm:$0x1]
      %v817 = vunpack.c.l.b16 %v761
      %v818 = vunpack.c.l.b16 %v762
      %v819 = vunpack.c.l.b16 %v764
      %v820 = vunpack.c.l.b16 %v765
      %v821 = vunpack.c.l.b16 %v767
      %v822 = vunpack.c.l.b16 %v768
      %v823 = vunpack.c.l.b16 %v770
      %v824 = vunpack.c.l.b16 %v771
      %v825 = vunpack.c.l.b16 %v773
      %v826 = vunpack.c.l.b16 %v774
      %v827 = vunpack.c.l.b16 %v776
      %v828 = vunpack.c.l.b16 %v777
      %v829 = vunpack.c.l.b16 %v779
      %v830 = vunpack.c.l.b16 %v780
      %v831 = vunpack.c.l.b16 %v782
      %v832 = vunpack.c.l.b16 %v783
      %v833 = vunpack.c.l.b16 %v785
      %v834 = vunpack.c.l.b16 %v786
      %v835 = vunpack.c.l.b16 %v788
      %v836 = vunpack.c.l.b16 %v789
      %v837 = vpack.c.b16 %v818, %v817
      %v838 = vpack.c.b16 %v820, %v819
      %v839 = vpack.c.b16 %v822, %v821
      %v840 = vpack.c.b16 %v824, %v823
      %v841 = vpack.c.b16 %v826, %v825
      %v842 = vpack.c.b16 %v828, %v827
      %v843 = vpack.c.b16 %v830, %v829
      %v844 = vpack.c.b16 %v832, %v831
      %v845 = vpack.c.b16 %v834, %v833
      %v846 = vpack.c.b16 %v836, %v835
      %v857 = vunpack.c.l.b16 %v763
      %v858 = vunpack.c.l.b16 %v766
      %v859 = vunpack.c.l.b16 %v769
      %v860 = vunpack.c.l.b16 %v772
      %v861 = vunpack.c.l.b16 %v775
      %v862 = vunpack.c.l.b16 %v778
      %v863 = vunpack.c.l.b16 %v781
      %v864 = vunpack.c.l.b16 %v784
      %v865 = vunpack.c.l.b16 %v787
      %v866 = vunpack.c.l.b16 %v790
      %v867 = vpack.c.b16 %v857, %v857
      %v868 = vpack.c.b16 %v858, %v858
      %v869 = vpack.c.b16 %v859, %v859
      %v870 = vpack.c.b16 %v860, %v860
      %v871 = vpack.c.b16 %v861, %v861
      %v872 = vpack.c.b16 %v862, %v862
      %v873 = vpack.c.b16 %v863, %v863
      %v874 = vpack.c.b16 %v864, %v864
      %v875 = vpack.c.b16 %v865, %v865
      %v876 = vpack.c.b16 %v866, %v866
      %vm877 = vsmask.f32 7424
      %v879 = vshrl.u32 %v837, 16
      %v881 = vshll.u32 %v837, 16
      %v883 = vrot.slane %v881, 1
      %v884 = vor.u32 %v879, %v883
      %v886 = vshll.u32 %v867, 16
      %v888 = vrot.slane %v886, 1
      %v889 = vsel %vm877, %v884, %v888
      %v891 = vshrl.u32 %v838, 16
      %v893 = vshll.u32 %v838, 16
      %v895 = vrot.slane %v893, 1
      %v896 = vor.u32 %v891, %v895
      %v898 = vshll.u32 %v868, 16
      %v900 = vrot.slane %v898, 1
      %v901 = vsel %vm877, %v896, %v900
      %v903 = vshrl.u32 %v839, 16
      %v905 = vshll.u32 %v839, 16
      %v907 = vrot.slane %v905, 1
      %v908 = vor.u32 %v903, %v907
      %v910 = vshll.u32 %v869, 16
      %v912 = vrot.slane %v910, 1
      %v913 = vsel %vm877, %v908, %v912
      %v915 = vshrl.u32 %v840, 16
      %v917 = vshll.u32 %v840, 16
      %v919 = vrot.slane %v917, 1
      %v920 = vor.u32 %v915, %v919
      %v922 = vshll.u32 %v870, 16
      %v924 = vrot.slane %v922, 1
      %v925 = vsel %vm877, %v920, %v924
      %v927 = vshrl.u32 %v841, 16
      %v929 = vshll.u32 %v841, 16
      %v931 = vrot.slane %v929, 1
      %v932 = vor.u32 %v927, %v931
      %v934 = vshll.u32 %v871, 16
      %v936 = vrot.slane %v934, 1
      %v937 = vsel %vm877, %v932, %v936
      %v939 = vshrl.u32 %v842, 16
      %v941 = vshll.u32 %v842, 16
      %v943 = vrot.slane %v941, 1
      %v944 = vor.u32 %v939, %v943
      %v946 = vshll.u32 %v872, 16
      %v948 = vrot.slane %v946, 1
      %v949 = vsel %vm877, %v944, %v948
      %v951 = vshrl.u32 %v843, 16
      %v953 = vshll.u32 %v843, 16
      %v955 = vrot.slane %v953, 1
      %v956 = vor.u32 %v951, %v955
      %v958 = vshll.u32 %v873, 16
      %v960 = vrot.slane %v958, 1
      %v961 = vsel %vm877, %v956, %v960
      %v963 = vshrl.u32 %v844, 16
      %v965 = vshll.u32 %v844, 16
      %v967 = vrot.slane %v965, 1
      %v968 = vor.u32 %v963, %v967
      %v970 = vshll.u32 %v874, 16
      %v972 = vrot.slane %v970, 1
      %v973 = vsel %vm877, %v968, %v972
      %v975 = vshrl.u32 %v845, 16
      %v977 = vshll.u32 %v845, 16
      %v979 = vrot.slane %v977, 1
      %v980 = vor.u32 %v975, %v979
      %v982 = vshll.u32 %v875, 16
      %v984 = vrot.slane %v982, 1
      %v985 = vsel %vm877, %v980, %v984
      %v987 = vshrl.u32 %v846, 16
      %v989 = vshll.u32 %v846, 16
      %v991 = vrot.slane %v989, 1
      %v992 = vor.u32 %v987, %v991
      %v994 = vshll.u32 %v876, 16
      %v996 = vrot.slane %v994, 1
      %v997 = vsel %vm877, %v992, %v996
      %998 = vrot.lane.b32.xlu0 %v889, 8
      %v999 = vpop.permute.xlu0 %998
      %1000 = vrot.lane.b32.xlu0 %v901, 8
      %v1001 = vpop.permute.xlu0 %1000
      %1002 = vrot.lane.b32.xlu0 %v913, 8
      %v1003 = vpop.permute.xlu0 %1002
      %1004 = vrot.lane.b32.xlu0 %v925, 8
      %v1005 = vpop.permute.xlu0 %1004
      %1006 = vrot.lane.b32.xlu0 %v937, 8
      %v1007 = vpop.permute.xlu0 %1006
      %1008 = vrot.lane.b32.xlu0 %v949, 8
      %v1009 = vpop.permute.xlu0 %1008
      %1010 = vrot.lane.b32.xlu0 %v961, 8
      %v1011 = vpop.permute.xlu0 %1010
      %1012 = vrot.lane.b32.xlu0 %v973, 8
      %v1013 = vpop.permute.xlu0 %1012
      %1014 = vrot.lane.b32.xlu0 %v985, 8
      %v1015 = vpop.permute.xlu0 %1014
      %1016 = vrot.lane.b32.xlu0 %v997, 8
      %v1017 = vpop.permute.xlu0 %1016
      %vm1018 = vcmask 1046528
      %v1019 = vrot.slane %v837, 1
      %v1020 = vrot.slane %v867, 1
      %v1021 = vsel %vm1018, %v1019, %v1020
      %v1022 = vrot.slane %v838, 1
      %v1023 = vrot.slane %v868, 1
      %v1024 = vsel %vm1018, %v1022, %v1023
      %v1025 = vrot.slane %v839, 1
      %v1026 = vrot.slane %v869, 1
      %v1027 = vsel %vm1018, %v1025, %v1026
      %v1028 = vrot.slane %v840, 1
      %v1029 = vrot.slane %v870, 1
      %v1030 = vsel %vm1018, %v1028, %v1029
      %v1031 = vrot.slane %v841, 1
      %v1032 = vrot.slane %v871, 1
      %v1033 = vsel %vm1018, %v1031, %v1032
      %v1034 = vrot.slane %v842, 1
      %v1035 = vrot.slane %v872, 1
      %v1036 = vsel %vm1018, %v1034, %v1035
      %v1037 = vrot.slane %v843, 1
      %v1038 = vrot.slane %v873, 1
      %v1039 = vsel %vm1018, %v1037, %v1038
      %v1040 = vrot.slane %v844, 1
      %v1041 = vrot.slane %v874, 1
      %v1042 = vsel %vm1018, %v1040, %v1041
      %v1043 = vrot.slane %v845, 1
      %v1044 = vrot.slane %v875, 1
      %v1045 = vsel %vm1018, %v1043, %v1044
      %v1046 = vrot.slane %v846, 1
      %v1047 = vrot.slane %v876, 1
      %v1048 = vsel %vm1018, %v1046, %v1047
      %1049 = vrot.lane.b32.xlu0 %v1021, 16
      %v1050 = vpop.permute.xlu0 %1049
      %1051 = vrot.lane.b32.xlu0 %v1024, 16
      %v1052 = vpop.permute.xlu0 %1051
      %1053 = vrot.lane.b32.xlu0 %v1027, 16
      %v1054 = vpop.permute.xlu0 %1053
      %1055 = vrot.lane.b32.xlu0 %v1030, 16
      %v1056 = vpop.permute.xlu0 %1055
      %1057 = vrot.lane.b32.xlu0 %v1033, 16
      %v1058 = vpop.permute.xlu0 %1057
      %1059 = vrot.lane.b32.xlu0 %v1036, 16
      %v1060 = vpop.permute.xlu0 %1059
      %1061 = vrot.lane.b32.xlu0 %v1039, 16
      %v1062 = vpop.permute.xlu0 %1061
      %1063 = vrot.lane.b32.xlu0 %v1042, 16
      %v1064 = vpop.permute.xlu0 %1063
      %1065 = vrot.lane.b32.xlu0 %v1045, 16
      %v1066 = vpop.permute.xlu0 %1065
      %1067 = vrot.lane.b32.xlu0 %v1048, 16
      %v1068 = vpop.permute.xlu0 %1067
      %v1071 = vunpack.c.l.b16 %v791
      %v1072 = vunpack.c.l.b16 %v792
      %v1073 = vpack.c.b16 %v1072, %v1071
      %1074 = vrot.lane.b32.xlu0 %v838, 24
      %v1075 = vpop.permute.xlu0 %1074
      %1076 = vrot.lane.b32.xlu0 %v839, 24
      %v1077 = vpop.permute.xlu0 %1076
      %1078 = vrot.lane.b32.xlu0 %v840, 24
      %v1079 = vpop.permute.xlu0 %1078
      %1080 = vrot.lane.b32.xlu0 %v841, 24
      %v1081 = vpop.permute.xlu0 %1080
      %1082 = vrot.lane.b32.xlu0 %v842, 24
      %v1083 = vpop.permute.xlu0 %1082
      %1084 = vrot.lane.b32.xlu0 %v843, 24
      %v1085 = vpop.permute.xlu0 %1084
      %1086 = vrot.lane.b32.xlu0 %v844, 24
      %v1087 = vpop.permute.xlu0 %1086
      %1088 = vrot.lane.b32.xlu0 %v845, 24
      %v1089 = vpop.permute.xlu0 %1088
      %1090 = vrot.lane.b32.xlu0 %v846, 24
      %v1091 = vpop.permute.xlu0 %1090
      %1092 = vrot.lane.b32.xlu0 %v1073, 24
      %v1093 = vpop.permute.xlu0 %1092
      %v1095 = vunpack.c.l.b16 %v793
      %v1096 = vpack.c.b16 %v1095, %v1095
      %v1098 = vshrl.u32 %v1073, 16
      %v1100 = vshll.u32 %v1073, 16
      %v1102 = vrot.slane %v1100, 1
      %v1103 = vor.u32 %v1098, %v1102
      %v1105 = vshll.u32 %v1096, 16
      %v1107 = vrot.slane %v1105, 1
      %v1108 = vsel %vm877, %v1103, %v1107
      %1109 = vrot.lane.b32.xlu0 %v901, 32
      %v1110 = vpop.permute.xlu0 %1109
      %1111 = vrot.lane.b32.xlu0 %v913, 32
      %v1112 = vpop.permute.xlu0 %1111
      %1113 = vrot.lane.b32.xlu0 %v925, 32
      %v1114 = vpop.permute.xlu0 %1113
      %1115 = vrot.lane.b32.xlu0 %v937, 32
      %v1116 = vpop.permute.xlu0 %1115
      %1117 = vrot.lane.b32.xlu0 %v949, 32
      %v1118 = vpop.permute.xlu0 %1117
      %1119 = vrot.lane.b32.xlu0 %v961, 32
      %v1120 = vpop.permute.xlu0 %1119
      %1121 = vrot.lane.b32.xlu0 %v973, 32
      %v1122 = vpop.permute.xlu0 %1121
      %1123 = vrot.lane.b32.xlu0 %v985, 32
      %v1124 = vpop.permute.xlu0 %1123
      %1125 = vrot.lane.b32.xlu0 %v997, 32
      %v1126 = vpop.permute.xlu0 %1125
      %1127 = vrot.lane.b32.xlu0 %v1108, 32
      %v1128 = vpop.permute.xlu0 %1127
      %v1129 = vrot.slane %v1073, 1
      %v1130 = vrot.slane %v1096, 1
      %v1131 = vsel %vm1018, %v1129, %v1130
      %1132 = vrot.lane.b32.xlu0 %v1024, 40
      %v1133 = vpop.permute.xlu0 %1132
      %1134 = vrot.lane.b32.xlu0 %v1027, 40
      %v1135 = vpop.permute.xlu0 %1134
      %1136 = vrot.lane.b32.xlu0 %v1030, 40
      %v1137 = vpop.permute.xlu0 %1136
      %1138 = vrot.lane.b32.xlu0 %v1033, 40
      %v1139 = vpop.permute.xlu0 %1138
      %1140 = vrot.lane.b32.xlu0 %v1036, 40
      %v1141 = vpop.permute.xlu0 %1140
      %1142 = vrot.lane.b32.xlu0 %v1039, 40
      %v1143 = vpop.permute.xlu0 %1142
      %1144 = vrot.lane.b32.xlu0 %v1042, 40
      %v1145 = vpop.permute.xlu0 %1144
      %1146 = vrot.lane.b32.xlu0 %v1045, 40
      %v1147 = vpop.permute.xlu0 %1146
      %1148 = vrot.lane.b32.xlu0 %v1048, 40
      %v1149 = vpop.permute.xlu0 %1148
      %1150 = vrot.lane.b32.xlu0 %v1131, 40
      %v1151 = vpop.permute.xlu0 %1150
      %v1154 = vunpack.c.l.b16 %v794
      %v1155 = vunpack.c.l.b16 %v795
      %v1156 = vpack.c.b16 %v1155, %v1154
      %1157 = vrot.lane.b32.xlu0 %v839, 48
      %v1158 = vpop.permute.xlu0 %1157
      %1159 = vrot.lane.b32.xlu0 %v840, 48
      %v1160 = vpop.permute.xlu0 %1159
      %1161 = vrot.lane.b32.xlu0 %v841, 48
      %v1162 = vpop.permute.xlu0 %1161
      %1163 = vrot.lane.b32.xlu0 %v842, 48
      %v1164 = vpop.permute.xlu0 %1163
      %1165 = vrot.lane.b32.xlu0 %v843, 48
      %v1166 = vpop.permute.xlu0 %1165
      %1167 = vrot.lane.b32.xlu0 %v844, 48
      %v1168 = vpop.permute.xlu0 %1167
      %1169 = vrot.lane.b32.xlu0 %v845, 48
      %v1170 = vpop.permute.xlu0 %1169
      %1171 = vrot.lane.b32.xlu0 %v846, 48
      %v1172 = vpop.permute.xlu0 %1171
      %1173 = vrot.lane.b32.xlu0 %v1073, 48
      %v1174 = vpop.permute.xlu0 %1173
      %1175 = vrot.lane.b32.xlu0 %v1156, 48
      %v1176 = vpop.permute.xlu0 %1175
      %v1178 = vunpack.c.l.b16 %v796
      %v1179 = vpack.c.b16 %v1178, %v1178
      %v1181 = vshrl.u32 %v1156, 16
      %v1183 = vshll.u32 %v1156, 16
      %v1185 = vrot.slane %v1183, 1
      %v1186 = vor.u32 %v1181, %v1185
      %v1188 = vshll.u32 %v1179, 16
      %v1190 = vrot.slane %v1188, 1
      %v1191 = vsel %vm877, %v1186, %v1190
      %1192 = vrot.lane.b32.xlu0 %v913, 56
      %v1193 = vpop.permute.xlu0 %1192
      %1194 = vrot.lane.b32.xlu0 %v925, 56
      %v1195 = vpop.permute.xlu0 %1194
      %1196 = vrot.lane.b32.xlu0 %v937, 56
      %v1197 = vpop.permute.xlu0 %1196
      %1198 = vrot.lane.b32.xlu0 %v949, 56
      %v1199 = vpop.permute.xlu0 %1198
      %1200 = vrot.lane.b32.xlu0 %v961, 56
      %v1201 = vpop.permute.xlu0 %1200
      %1202 = vrot.lane.b32.xlu0 %v973, 56
      %v1203 = vpop.permute.xlu0 %1202
      %1204 = vrot.lane.b32.xlu0 %v985, 56
      %v1205 = vpop.permute.xlu0 %1204
      %1206 = vrot.lane.b32.xlu0 %v997, 56
      %v1207 = vpop.permute.xlu0 %1206
      %1208 = vrot.lane.b32.xlu0 %v1108, 56
      %v1209 = vpop.permute.xlu0 %1208
      %1210 = vrot.lane.b32.xlu0 %v1191, 56
      %v1211 = vpop.permute.xlu0 %1210
      %v1212 = vrot.slane %v1156, 1
      %v1213 = vrot.slane %v1179, 1
      %v1214 = vsel %vm1018, %v1212, %v1213
      %1215 = vrot.lane.b32.xlu0 %v1027, 64
      %v1216 = vpop.permute.xlu0 %1215
      %1217 = vrot.lane.b32.xlu0 %v1030, 64
      %v1218 = vpop.permute.xlu0 %1217
      %1219 = vrot.lane.b32.xlu0 %v1033, 64
      %v1220 = vpop.permute.xlu0 %1219
      %1221 = vrot.lane.b32.xlu0 %v1036, 64
      %v1222 = vpop.permute.xlu0 %1221
      %1223 = vrot.lane.b32.xlu0 %v1039, 64
      %v1224 = vpop.permute.xlu0 %1223
      %1225 = vrot.lane.b32.xlu0 %v1042, 64
      %v1226 = vpop.permute.xlu0 %1225
      %1227 = vrot.lane.b32.xlu0 %v1045, 64
      %v1228 = vpop.permute.xlu0 %1227
      %1229 = vrot.lane.b32.xlu0 %v1048, 64
      %v1230 = vpop.permute.xlu0 %1229
      %1231 = vrot.lane.b32.xlu0 %v1131, 64
      %v1232 = vpop.permute.xlu0 %1231
      %1233 = vrot.lane.b32.xlu0 %v1214, 64
      %v1234 = vpop.permute.xlu0 %1233
      %vm1235 = vcmask 64512
      %v1237 = vsel %vm1235, %v837, %v999
      %v1239 = vsel %vm1235, %v838, %v1001
      %v1241 = vsel %vm1235, %v839, %v1003
      %v1243 = vsel %vm1235, %v840, %v1005
      %v1245 = vsel %vm1235, %v841, %v1007
      %v1247 = vsel %vm1235, %v842, %v1009
      %v1249 = vsel %vm1235, %v843, %v1011
      %v1251 = vsel %vm1235, %v844, %v1013
      %v1253 = vsel %vm1235, %v845, %v1015
      %v1255 = vsel %vm1235, %v846, %v1017
      %vm1256 = vcmask 130048
      %v1258 = vsel %vm1256, %v1237, %v1050
      %v1260 = vsel %vm1256, %v1239, %v1052
      %v1262 = vsel %vm1256, %v1241, %v1054
      %v1264 = vsel %vm1256, %v1243, %v1056
      %v1266 = vsel %vm1256, %v1245, %v1058
      %v1268 = vsel %vm1256, %v1247, %v1060
      %v1270 = vsel %vm1256, %v1249, %v1062
      %v1272 = vsel %vm1256, %v1251, %v1064
      %v1274 = vsel %vm1256, %v1253, %v1066
      %v1276 = vsel %vm1256, %v1255, %v1068
      %vm1277 = vcmask 195584
      %v1279 = vsel %vm1277, %v1258, %v1075
      %v1281 = vsel %vm1277, %v1260, %v1077
      %v1283 = vsel %vm1277, %v1262, %v1079
      %v1285 = vsel %vm1277, %v1264, %v1081
      %v1287 = vsel %vm1277, %v1266, %v1083
      %v1289 = vsel %vm1277, %v1268, %v1085
      %v1291 = vsel %vm1277, %v1270, %v1087
      %v1293 = vsel %vm1277, %v1272, %v1089
      %v1295 = vsel %vm1277, %v1274, %v1091
      %v1297 = vsel %vm1277, %v1276, %v1093
      %vm1298 = vcmask 261120
      %v1300 = vsel %vm1298, %v1279, %v1110
      %v1302 = vsel %vm1298, %v1281, %v1112
      %v1304 = vsel %vm1298, %v1283, %v1114
      %v1306 = vsel %vm1298, %v1285, %v1116
      %v1308 = vsel %vm1298, %v1287, %v1118
      %v1310 = vsel %vm1298, %v1289, %v1120
      %v1312 = vsel %vm1298, %v1291, %v1122
      %v1314 = vsel %vm1298, %v1293, %v1124
      %v1316 = vsel %vm1298, %v1295, %v1126
      %v1318 = vsel %vm1298, %v1297, %v1128
      %vm1319 = vcmask 326656
      %v1321 = vsel %vm1319, %v1300, %v1133
      %v1323 = vsel %vm1319, %v1302, %v1135
      %v1325 = vsel %vm1319, %v1304, %v1137
      %v1327 = vsel %vm1319, %v1306, %v1139
      %v1329 = vsel %vm1319, %v1308, %v1141
      %v1331 = vsel %vm1319, %v1310, %v1143
      %v1333 = vsel %vm1319, %v1312, %v1145
      %v1335 = vsel %vm1319, %v1314, %v1147
      %v1337 = vsel %vm1319, %v1316, %v1149
      %v1339 = vsel %vm1319, %v1318, %v1151
      %vm1340 = vcmask 392192
      %v1342 = vsel %vm1340, %v1321, %v1158
      %v1344 = vsel %vm1340, %v1323, %v1160
      %v1346 = vsel %vm1340, %v1325, %v1162
      %v1348 = vsel %vm1340, %v1327, %v1164
      %v1350 = vsel %vm1340, %v1329, %v1166
      %v1352 = vsel %vm1340, %v1331, %v1168
      %v1354 = vsel %vm1340, %v1333, %v1170
      %v1356 = vsel %vm1340, %v1335, %v1172
      %v1358 = vsel %vm1340, %v1337, %v1174
      %v1360 = vsel %vm1340, %v1339, %v1176
      %vm1361 = vcmask 457728
      %v1363 = vsel %vm1361, %v1342, %v1193
      %v1365 = vsel %vm1361, %v1344, %v1195
      %v1367 = vsel %vm1361, %v1346, %v1197
      %v1369 = vsel %vm1361, %v1348, %v1199
      %v1371 = vsel %vm1361, %v1350, %v1201
      %v1373 = vsel %vm1361, %v1352, %v1203
      %v1375 = vsel %vm1361, %v1354, %v1205
      %v1377 = vsel %vm1361, %v1356, %v1207
      %v1379 = vsel %vm1361, %v1358, %v1209
      %v1381 = vsel %vm1361, %v1360, %v1211
      %vm1382 = vcmask 523264
      %v1384 = vsel %vm1382, %v1363, %v1216
      %v1386 = vsel %vm1382, %v1365, %v1218
      %v1388 = vsel %vm1382, %v1367, %v1220
      %v1390 = vsel %vm1382, %v1369, %v1222
      %v1392 = vsel %vm1382, %v1371, %v1224
      %v1394 = vsel %vm1382, %v1373, %v1226
      %v1396 = vsel %vm1382, %v1375, %v1228
      %v1398 = vsel %vm1382, %v1377, %v1230
      %v1400 = vsel %vm1382, %v1379, %v1232
      %v1402 = vsel %vm1382, %v1381, %v1234
      %v1403 = vld [vmem:[%s1] sm:$0xf]
      %v1404 = vld [vmem:[%s1 + $0x4] sm:$0xf]
      %v1405 = vld [vmem:[%s1 + $0x8] sm:$0xf]
      %v1406 = vld [vmem:[%s1 + $0xc] sm:$0xf]
      %v1407 = vld [vmem:[%s1 + $0x10] sm:$0xf]
      %v1408 = vld [vmem:[%s1 + $0x14] sm:$0xf]
      %v1409 = vld [vmem:[%s1 + $0x18] sm:$0xf]
      %v1410 = vld [vmem:[%s1 + $0x1c] sm:$0xf]
      %v1411 = vld [vmem:[%s1 + $0x20] sm:$0xf]
      %v1412 = vld [vmem:[%s2] sm:$0x1]
      %v1414 = vperm.slane %v1412, 0
      %v1425 = vunpack.c.l.b16 %v1403
      %v1426 = vunpack.c.l.b16 %v1404
      %v1427 = vunpack.c.l.b16 %v1405
      %v1428 = vunpack.c.l.b16 %v1406
      %v1429 = vunpack.c.l.b16 %v1407
      %v1430 = vunpack.c.l.b16 %v1408
      %v1431 = vunpack.c.l.b16 %v1409
      %v1432 = vunpack.c.l.b16 %v1410
      %v1433 = vunpack.c.l.b16 %v1411
      %v1434 = vpack.c.b16 %v1426, %v1425
      %v1435 = vpack.c.b16 %v1428, %v1427
      %v1436 = vpack.c.b16 %v1430, %v1429
      %v1437 = vpack.c.b16 %v1432, %v1431
      %v1438 = vpack.c.b16 %v1433, %v1433
      %vm1443 = vcmask 588800
      %v1444 = vsel %vm1443, %v1384, 0
      %v1446 = vsel %vm1443, %v1386, 0
      %v1448 = vsel %vm1443, %v1388, 0
      %v1450 = vsel %vm1443, %v1390, 0
      %v1452 = vsel %vm1443, %v1392, 0
      %v1454 = vsel %vm1443, %v1394, 0
      %v1456 = vsel %vm1443, %v1396, 0
      %v1458 = vsel %vm1443, %v1398, 0
      %v1460 = vsel %vm1443, %v1400, 0
      %v1462 = vsel %vm1443, %v1402, 0
      %vm1464 = vcmask 1043456
      %v1466 = vsel %vm1464, %v1438, 0
      %1468 = vmatpush.bf16.msra.mxu0 0
      %1469 = vmatpush.bf16.msra.mxu0 0
      %1470 = vmatpush.bf16.msra.mxu0 0
      %1471 = vmatpush.bf16.msra.mxu0 %v1466
      %1472 = vmatpush.bf16.msra.mxu0 %v1437
      %1473 = vmatpush.bf16.msra.mxu0 %v1436
      %1474 = vmatpush.bf16.msra.mxu0 %v1435
      %1475 = vmatpush.bf16.msra.mxu0 %v1434
      %1476 = vmatmul.bf16.gmra.mxu0 %v1444
      %v1477 = vpop.f32.mrf.mxu0
      %v1478 = vadd.f32 %v1414, %v1477
      %v1479 = vpop.f32.mrf.mxu0
      %v1480 = vadd.f32 %v1414, %v1479
      %1481 = vmatmul.bf16.gmra.mxu0 %v1446
      %v1482 = vpop.f32.mrf.mxu0
      %v1483 = vadd.f32 %v1414, %v1482
      %v1484 = vpop.f32.mrf.mxu0
      %v1485 = vadd.f32 %v1414, %v1484
      %1486 = vmatmul.bf16.gmra.mxu0 %v1448
      %v1487 = vpop.f32.mrf.mxu0
      %v1488 = vadd.f32 %v1414, %v1487
      %v1489 = vpop.f32.mrf.mxu0
      %v1490 = vadd.f32 %v1414, %v1489
      %1491 = vmatmul.bf16.gmra.mxu0 %v1450
      %v1492 = vpop.f32.mrf.mxu0
      %v1493 = vadd.f32 %v1414, %v1492
      %v1494 = vpop.f32.mrf.mxu0
      %v1495 = vadd.f32 %v1414, %v1494
      %1496 = vmatmul.bf16.gmra.mxu0 %v1452
      %v1497 = vpop.f32.mrf.mxu0
      %v1498 = vadd.f32 %v1414, %v1497
      %v1499 = vpop.f32.mrf.mxu0
      %v1500 = vadd.f32 %v1414, %v1499
      %1501 = vmatmul.bf16.gmra.mxu0 %v1454
      %v1502 = vpop.f32.mrf.mxu0
      %v1503 = vadd.f32 %v1414, %v1502
      %v1504 = vpop.f32.mrf.mxu0
      %v1505 = vadd.f32 %v1414, %v1504
      %1506 = vmatmul.bf16.gmra.mxu0 %v1456
      %v1507 = vpop.f32.mrf.mxu0
      %v1508 = vadd.f32 %v1414, %v1507
      %v1509 = vpop.f32.mrf.mxu0
      %v1510 = vadd.f32 %v1414, %v1509
      %1511 = vmatmul.bf16.gmra.mxu0 %v1458
      %v1512 = vpop.f32.mrf.mxu0
      %v1513 = vadd.f32 %v1414, %v1512
      %v1514 = vpop.f32.mrf.mxu0
      %v1515 = vadd.f32 %v1414, %v1514
      %1516 = vmatmul.bf16.gmra.mxu0 %v1460
      %v1517 = vpop.f32.mrf.mxu0
      %v1518 = vadd.f32 %v1414, %v1517
      %v1519 = vpop.f32.mrf.mxu0
      %v1520 = vadd.f32 %v1414, %v1519
      %1521 = vmatmul.bf16.gmra.mxu0 %v1462
      %v1522 = vpop.f32.mrf.mxu0
      %v1523 = vadd.f32 %v1414, %v1522
      %v1524 = vpop.f32.mrf.mxu0
      %v1525 = vadd.f32 %v1414, %v1524
      %1526 = vdwg.mxu0
      %v1527 = vmax.f32 %v1478, 0.0
      %v1528 = vmax.f32 %v1480, 0.0
      %v1529 = vmax.f32 %v1483, 0.0
      %v1530 = vmax.f32 %v1485, 0.0
      %v1531 = vmax.f32 %v1488, 0.0
      %v1532 = vmax.f32 %v1490, 0.0
      %v1533 = vmax.f32 %v1493, 0.0
      %v1534 = vmax.f32 %v1495, 0.0
      %v1535 = vmax.f32 %v1498, 0.0
      %v1536 = vmax.f32 %v1500, 0.0
      %v1537 = vmax.f32 %v1503, 0.0
      %v1538 = vmax.f32 %v1505, 0.0
      %v1539 = vmax.f32 %v1508, 0.0
      %v1540 = vmax.f32 %v1510, 0.0
      %v1541 = vmax.f32 %v1513, 0.0
      %v1542 = vmax.f32 %v1515, 0.0
      %v1543 = vmax.f32 %v1518, 0.0
      %v1544 = vmax.f32 %v1520, 0.0
      %v1545 = vmax.f32 %v1523, 0.0
      %v1546 = vmax.f32 %v1525, 0.0
      %v1547 = vld [vmem:[#allocation3] sm:$0x1]
      %v1548 = vsel %vm254, 0, %v1547
      %1549 = vst [vmem:[#allocation3] sm:$0x1] %v1548
      %v1550 = vld [vmem:[#allocation3 + $0xc] sm:$0x1]
      %v1551 = vsel %vm254, 0, %v1550
      %1552 = vst [vmem:[#allocation3 + $0xc] sm:$0x1] %v1551
      %v1553 = vld [vmem:[#allocation3 + $0x18] sm:$0x1]
      %v1554 = vsel %vm254, 0, %v1553
      %1555 = vst [vmem:[#allocation3 + $0x18] sm:$0x1] %v1554
      %v1556 = vld [vmem:[#allocation3 + $0x24] sm:$0x1]
      %v1557 = vsel %vm254, 0, %v1556
      %1558 = vst [vmem:[#allocation3 + $0x24] sm:$0x1] %v1557
      %v1559 = vld [vmem:[#allocation3 + $0x30] sm:$0x1]
      %v1560 = vsel %vm254, 0, %v1559
      %1561 = vst [vmem:[#allocation3 + $0x30] sm:$0x1] %v1560
      %v1562 = vld [vmem:[#allocation3 + $0x3c] sm:$0x1]
      %v1563 = vsel %vm254, 0, %v1562
      %1564 = vst [vmem:[#allocation3 + $0x3c] sm:$0x1] %v1563
      %v1565 = vld [vmem:[#allocation3 + $0x48] sm:$0x1]
      %v1566 = vsel %vm254, 0, %v1565
      %1567 = vst [vmem:[#allocation3 + $0x48] sm:$0x1] %v1566
      %v1568 = vld [vmem:[#allocation3 + $0x54] sm:$0x1]
      %v1569 = vsel %vm254, 0, %v1568
      %1570 = vst [vmem:[#allocation3 + $0x54] sm:$0x1] %v1569
      %v1571 = vld [vmem:[#allocation3 + $0x60] sm:$0x1]
      %v1572 = vsel %vm254, 0, %v1571
      %1573 = vst [vmem:[#allocation3 + $0x60] sm:$0x1] %v1572
      %v1574 = vld [vmem:[#allocation3 + $0x6c] sm:$0x1]
      %v1575 = vsel %vm254, 0, %v1574
      %1576 = vst [vmem:[#allocation3 + $0x6c] sm:$0x1] %v1575
      %v1577 = vld [vmem:[#allocation3 + $0x8] sm:$0x1]
      %v1578 = vsel %vm292, 0, %v1577
      %1579 = vst [vmem:[#allocation3 + $0x8] sm:$0x1] %v1578
      %v1580 = vld [vmem:[#allocation3 + $0x14] sm:$0x1]
      %v1581 = vsel %vm292, 0, %v1580
      %1582 = vst [vmem:[#allocation3 + $0x14] sm:$0x1] %v1581
      %v1583 = vld [vmem:[#allocation3 + $0x20] sm:$0x1]
      %v1584 = vsel %vm292, 0, %v1583
      %1585 = vst [vmem:[#allocation3 + $0x20] sm:$0x1] %v1584
      %v1586 = vld [vmem:[#allocation3 + $0x2c] sm:$0x1]
      %v1587 = vsel %vm292, 0, %v1586
      %1588 = vst [vmem:[#allocation3 + $0x2c] sm:$0x1] %v1587
      %v1589 = vld [vmem:[#allocation3 + $0x38] sm:$0x1]
      %v1590 = vsel %vm292, 0, %v1589
      %1591 = vst [vmem:[#allocation3 + $0x38] sm:$0x1] %v1590
      %v1592 = vld [vmem:[#allocation3 + $0x44] sm:$0x1]
      %v1593 = vsel %vm292, 0, %v1592
      %1594 = vst [vmem:[#allocation3 + $0x44] sm:$0x1] %v1593
      %v1595 = vld [vmem:[#allocation3 + $0x50] sm:$0x1]
      %v1596 = vsel %vm292, 0, %v1595
      %1597 = vst [vmem:[#allocation3 + $0x50] sm:$0x1] %v1596
      %v1598 = vld [vmem:[#allocation3 + $0x5c] sm:$0x1]
      %v1599 = vsel %vm292, 0, %v1598
      %1600 = vst [vmem:[#allocation3 + $0x5c] sm:$0x1] %v1599
      %v1601 = vld [vmem:[#allocation3 + $0x68] sm:$0x1]
      %v1602 = vsel %vm292, 0, %v1601
      %1603 = vst [vmem:[#allocation3 + $0x68] sm:$0x1] %v1602
      %v1604 = vld [vmem:[#allocation3 + $0x74] sm:$0x1]
      %v1605 = vsel %vm292, 0, %v1604
      %1606 = vst [vmem:[#allocation3 + $0x74] sm:$0x1] %v1605
      %v1607 = vpack.c.bf16 %v1527, %v1527
      %v1608 = vpack.c.bf16 %v1528, %v1528
      %v1609 = vpack.c.bf16 %v1529, %v1529
      %v1610 = vpack.c.bf16 %v1530, %v1530
      %v1611 = vpack.c.bf16 %v1531, %v1531
      %v1612 = vpack.c.bf16 %v1532, %v1532
      %v1613 = vpack.c.bf16 %v1533, %v1533
      %v1614 = vpack.c.bf16 %v1534, %v1534
      %v1615 = vpack.c.bf16 %v1535, %v1535
      %v1616 = vpack.c.bf16 %v1536, %v1536
      %v1617 = vpack.c.bf16 %v1537, %v1537
      %v1618 = vpack.c.bf16 %v1538, %v1538
      %v1619 = vpack.c.bf16 %v1539, %v1539
      %v1620 = vpack.c.bf16 %v1540, %v1540
      %v1621 = vpack.c.bf16 %v1541, %v1541
      %v1622 = vpack.c.bf16 %v1542, %v1542
      %v1623 = vpack.c.bf16 %v1543, %v1543
      %v1624 = vpack.c.bf16 %v1544, %v1544
      %v1625 = vpack.c.bf16 %v1545, %v1545
      %v1626 = vpack.c.bf16 %v1546, %v1546
      %v1628 = vshrl.u32 %v1607, 16
      %v1630 = vrot.slane %v1628, 7
      %v1631 = vshll.u32 %v1607, 16
      %v1633 = vor.u32 %v1630, %v1631
      %v1634 = vrot.slane %v1630, 4
      %v1636 = vshrl.u32 %v1608, 16
      %v1638 = vrot.slane %v1636, 7
      %v1639 = vshll.u32 %v1608, 16
      %v1641 = vor.u32 %v1638, %v1639
      %v1642 = vsel %vm364, %v1634, %v1641
      %v1643 = vrot.slane %v1638, 4
      %v1645 = vshrl.u32 %v1609, 16
      %v1647 = vrot.slane %v1645, 7
      %v1648 = vshll.u32 %v1609, 16
      %v1650 = vor.u32 %v1647, %v1648
      %v1651 = vrot.slane %v1647, 4
      %v1653 = vshrl.u32 %v1610, 16
      %v1655 = vrot.slane %v1653, 7
      %v1656 = vshll.u32 %v1610, 16
      %v1658 = vor.u32 %v1655, %v1656
      %v1659 = vsel %vm364, %v1651, %v1658
      %v1660 = vrot.slane %v1655, 4
      %v1662 = vshrl.u32 %v1611, 16
      %v1664 = vrot.slane %v1662, 7
      %v1665 = vshll.u32 %v1611, 16
      %v1667 = vor.u32 %v1664, %v1665
      %v1668 = vrot.slane %v1664, 4
      %v1670 = vshrl.u32 %v1612, 16
      %v1672 = vrot.slane %v1670, 7
      %v1673 = vshll.u32 %v1612, 16
      %v1675 = vor.u32 %v1672, %v1673
      %v1676 = vsel %vm364, %v1668, %v1675
      %v1677 = vrot.slane %v1672, 4
      %v1679 = vshrl.u32 %v1613, 16
      %v1681 = vrot.slane %v1679, 7
      %v1682 = vshll.u32 %v1613, 16
      %v1684 = vor.u32 %v1681, %v1682
      %v1685 = vrot.slane %v1681, 4
      %v1687 = vshrl.u32 %v1614, 16
      %v1689 = vrot.slane %v1687, 7
      %v1690 = vshll.u32 %v1614, 16
      %v1692 = vor.u32 %v1689, %v1690
      %v1693 = vsel %vm364, %v1685, %v1692
      %v1694 = vrot.slane %v1689, 4
      %v1696 = vshrl.u32 %v1615, 16
      %v1698 = vrot.slane %v1696, 7
      %v1699 = vshll.u32 %v1615, 16
      %v1701 = vor.u32 %v1698, %v1699
      %v1702 = vrot.slane %v1698, 4
      %v1704 = vshrl.u32 %v1616, 16
      %v1706 = vrot.slane %v1704, 7
      %v1707 = vshll.u32 %v1616, 16
      %v1709 = vor.u32 %v1706, %v1707
      %v1710 = vsel %vm364, %v1702, %v1709
      %v1711 = vrot.slane %v1706, 4
      %v1713 = vshrl.u32 %v1617, 16
      %v1715 = vrot.slane %v1713, 7
      %v1716 = vshll.u32 %v1617, 16
      %v1718 = vor.u32 %v1715, %v1716
      %v1719 = vrot.slane %v1715, 4
      %v1721 = vshrl.u32 %v1618, 16
      %v1723 = vrot.slane %v1721, 7
      %v1724 = vshll.u32 %v1618, 16
      %v1726 = vor.u32 %v1723, %v1724
      %v1727 = vsel %vm364, %v1719, %v1726
      %v1728 = vrot.slane %v1723, 4
      %v1730 = vshrl.u32 %v1619, 16
      %v1732 = vrot.slane %v1730, 7
      %v1733 = vshll.u32 %v1619, 16
      %v1735 = vor.u32 %v1732, %v1733
      %v1736 = vrot.slane %v1732, 4
      %v1738 = vshrl.u32 %v1620, 16
      %v1740 = vrot.slane %v1738, 7
      %v1741 = vshll.u32 %v1620, 16
      %v1743 = vor.u32 %v1740, %v1741
      %v1744 = vsel %vm364, %v1736, %v1743
      %v1745 = vrot.slane %v1740, 4
      %v1747 = vshrl.u32 %v1621, 16
      %v1749 = vrot.slane %v1747, 7
      %v1750 = vshll.u32 %v1621, 16
      %v1752 = vor.u32 %v1749, %v1750
      %v1753 = vrot.slane %v1749, 4
      %v1755 = vshrl.u32 %v1622, 16
      %v1757 = vrot.slane %v1755, 7
      %v1758 = vshll.u32 %v1622, 16
      %v1760 = vor.u32 %v1757, %v1758
      %v1761 = vsel %vm364, %v1753, %v1760
      %v1762 = vrot.slane %v1757, 4
      %v1764 = vshrl.u32 %v1623, 16
      %v1766 = vrot.slane %v1764, 7
      %v1767 = vshll.u32 %v1623, 16
      %v1769 = vor.u32 %v1766, %v1767
      %v1770 = vrot.slane %v1766, 4
      %v1772 = vshrl.u32 %v1624, 16
      %v1774 = vrot.slane %v1772, 7
      %v1775 = vshll.u32 %v1624, 16
      %v1777 = vor.u32 %v1774, %v1775
      %v1778 = vsel %vm364, %v1770, %v1777
      %v1779 = vrot.slane %v1774, 4
      %v1781 = vshrl.u32 %v1625, 16
      %v1783 = vrot.slane %v1781, 7
      %v1784 = vshll.u32 %v1625, 16
      %v1786 = vor.u32 %v1783, %v1784
      %v1787 = vrot.slane %v1783, 4
      %v1789 = vshrl.u32 %v1626, 16
      %v1791 = vrot.slane %v1789, 7
      %v1792 = vshll.u32 %v1626, 16
      %v1794 = vor.u32 %v1791, %v1792
      %v1795 = vsel %vm364, %v1787, %v1794
      %v1796 = vrot.slane %v1791, 4
      %v1827 = vld [vmem:[#allocation3] sm:$0xf]
      %v1828 = vsel %vm527, %v1633, %v1827
      %1829 = vst [vmem:[#allocation3] sm:$0xf] %v1828
      %1830 = vst.msk [vmem:[#allocation3 + $0x4] sm:$0xf] %vm531, %v1642
      %v1831 = vld [vmem:[#allocation3 + $0x8] sm:$0x1]
      %v1832 = vsel %vm254, %v1643, %v1831
      %1833 = vst [vmem:[#allocation3 + $0x8] sm:$0x1] %v1832
      %v1834 = vld [vmem:[#allocation3 + $0xc] sm:$0xf]
      %v1835 = vsel %vm527, %v1650, %v1834
      %1836 = vst [vmem:[#allocation3 + $0xc] sm:$0xf] %v1835
      %1837 = vst.msk [vmem:[#allocation3 + $0x10] sm:$0xf] %vm531, %v1659
      %v1838 = vld [vmem:[#allocation3 + $0x14] sm:$0x1]
      %v1839 = vsel %vm254, %v1660, %v1838
      %1840 = vst [vmem:[#allocation3 + $0x14] sm:$0x1] %v1839
      %v1841 = vld [vmem:[#allocation3 + $0x18] sm:$0xf]
      %v1842 = vsel %vm527, %v1667, %v1841
      %1843 = vst [vmem:[#allocation3 + $0x18] sm:$0xf] %v1842
      %1844 = vst.msk [vmem:[#allocation3 + $0x1c] sm:$0xf] %vm531, %v1676
      %v1845 = vld [vmem:[#allocation3 + $0x20] sm:$0x1]
      %v1846 = vsel %vm254, %v1677, %v1845
      %1847 = vst [vmem:[#allocation3 + $0x20] sm:$0x1] %v1846
      %v1848 = vld [vmem:[#allocation3 + $0x24] sm:$0xf]
      %v1849 = vsel %vm527, %v1684, %v1848
      %1850 = vst [vmem:[#allocation3 + $0x24] sm:$0xf] %v1849
      %1851 = vst.msk [vmem:[#allocation3 + $0x28] sm:$0xf] %vm531, %v1693
      %v1852 = vld [vmem:[#allocation3 + $0x2c] sm:$0x1]
      %v1853 = vsel %vm254, %v1694, %v1852
      %1854 = vst [vmem:[#allocation3 + $0x2c] sm:$0x1] %v1853
      %v1855 = vld [vmem:[#allocation3 + $0x30] sm:$0xf]
      %v1856 = vsel %vm527, %v1701, %v1855
      %1857 = vst [vmem:[#allocation3 + $0x30] sm:$0xf] %v1856
      %1858 = vst.msk [vmem:[#allocation3 + $0x34] sm:$0xf] %vm531, %v1710
      %v1859 = vld [vmem:[#allocation3 + $0x38] sm:$0x1]
      %v1860 = vsel %vm254, %v1711, %v1859
      %1861 = vst [vmem:[#allocation3 + $0x38] sm:$0x1] %v1860
      %v1862 = vld [vmem:[#allocation3 + $0x3c] sm:$0xf]
      %v1863 = vsel %vm527, %v1718, %v1862
      %1864 = vst [vmem:[#allocation3 + $0x3c] sm:$0xf] %v1863
      %1865 = vst.msk [vmem:[#allocation3 + $0x40] sm:$0xf] %vm531, %v1727
      %v1866 = vld [vmem:[#allocation3 + $0x44] sm:$0x1]
      %v1867 = vsel %vm254, %v1728, %v1866
      %1868 = vst [vmem:[#allocation3 + $0x44] sm:$0x1] %v1867
      %v1869 = vld [vmem:[#allocation3 + $0x48] sm:$0xf]
      %v1870 = vsel %vm527, %v1735, %v1869
      %1871 = vst [vmem:[#allocation3 + $0x48] sm:$0xf] %v1870
      %1872 = vst.msk [vmem:[#allocation3 + $0x4c] sm:$0xf] %vm531, %v1744
      %v1873 = vld [vmem:[#allocation3 + $0x50] sm:$0x1]
      %v1874 = vsel %vm254, %v1745, %v1873
      %1875 = vst [vmem:[#allocation3 + $0x50] sm:$0x1] %v1874
      %v1876 = vld [vmem:[#allocation3 + $0x54] sm:$0xf]
      %v1877 = vsel %vm527, %v1752, %v1876
      %1878 = vst [vmem:[#allocation3 + $0x54] sm:$0xf] %v1877
      %1879 = vst.msk [vmem:[#allocation3 + $0x58] sm:$0xf] %vm531, %v1761
      %v1880 = vld [vmem:[#allocation3 + $0x5c] sm:$0x1]
      %v1881 = vsel %vm254, %v1762, %v1880
      %1882 = vst [vmem:[#allocation3 + $0x5c] sm:$0x1] %v1881
      %v1883 = vld [vmem:[#allocation3 + $0x60] sm:$0xf]
      %v1884 = vsel %vm527, %v1769, %v1883
      %1885 = vst [vmem:[#allocation3 + $0x60] sm:$0xf] %v1884
      %1886 = vst.msk [vmem:[#allocation3 + $0x64] sm:$0xf] %vm531, %v1778
      %v1887 = vld [vmem:[#allocation3 + $0x68] sm:$0x1]
      %v1888 = vsel %vm254, %v1779, %v1887
      %1889 = vst [vmem:[#allocation3 + $0x68] sm:$0x1] %v1888
      %v1890 = vld [vmem:[#allocation3 + $0x6c] sm:$0xf]
      %v1891 = vsel %vm527, %v1786, %v1890
      %1892 = vst [vmem:[#allocation3 + $0x6c] sm:$0xf] %v1891
      %1893 = vst.msk [vmem:[#allocation3 + $0x70] sm:$0xf] %vm531, %v1795
      %v1894 = vld [vmem:[#allocation3 + $0x74] sm:$0x1]
      %v1895 = vsel %vm254, %v1796, %v1894
      %1896 = vst [vmem:[#allocation3 + $0x74] sm:$0x1] %v1895
      // Predicated region
      $region57: #{tpu_custom_call.1} parent=39 // pred_check
        %p1897 = pneg %p654
      $region58: #{tpu_custom_call.1} parent=39 // pred_check_branch
        %1899 = sbr.rel (%p1897) target = $region60
      $region59: #{tpu_custom_call.1} parent=39 // pred_region
        %1900 = vst.msk [vmem:[#allocation3] sm:$0xf] %vm531, 0
        %1901 = vst.msk [vmem:[#allocation3 + $0x4] sm:$0xf] %vm531, 0
        %vm1902 = vcmask 57344
        %1903 = vst.msk [vmem:[#allocation3 + $0x8] sm:$0x1] %vm1902, 0
      $region60: #{tpu_custom_call.1} parent=39 // pred_fallthru
        _
      // Predicated region
      $region61: #{tpu_custom_call.1} parent=39 // pred_check
        %p1904 = pneg %p742
      $region62: #{tpu_custom_call.1} parent=39 // pred_check_branch
        %1906 = sbr.rel (%p1904) target = $region64
      $region63: #{tpu_custom_call.1} parent=39 // pred_region
        %s1907 = scalar_lea.vmem [#allocation3], 108
        %1908 = vst.msk [vmem:[%s1907] sm:$0xf] %vm531, 0
        %1909 = vst.msk [vmem:[%s1907 + $0x4] sm:$0xf] %vm531, 0
        %vm1910 = vcmask 57344
        %1911 = vst.msk [vmem:[%s1907 + $0x8] sm:$0x1] %vm1910, 0
      $region64: #{tpu_custom_call.1} parent=39 // pred_fallthru
        _
      %v1912 = vld [vmem:[#allocation3] sm:$0xf]
      %v1913 = vld [vmem:[#allocation3 + $0x4] sm:$0xf]
      %v1914 = vld [vmem:[#allocation3 + $0x8] sm:$0x1]
      %v1915 = vld [vmem:[#allocation3 + $0xc] sm:$0xf]
      %v1916 = vld [vmem:[#allocation3 + $0x10] sm:$0xf]
      %v1917 = vld [vmem:[#allocation3 + $0x14] sm:$0x1]
      %v1918 = vld [vmem:[#allocation3 + $0x18] sm:$0xf]
      %v1919 = vld [vmem:[#allocation3 + $0x1c] sm:$0xf]
      %v1920 = vld [vmem:[#allocation3 + $0x20] sm:$0x1]
      %v1921 = vld [vmem:[#allocation3 + $0x24] sm:$0xf]
      %v1922 = vld [vmem:[#allocation3 + $0x28] sm:$0xf]
      %v1923 = vld [vmem:[#allocation3 + $0x2c] sm:$0x1]
      %v1924 = vld [vmem:[#allocation3 + $0x30] sm:$0xf]
      %v1925 = vld [vmem:[#allocation3 + $0x34] sm:$0xf]
      %v1926 = vld [vmem:[#allocation3 + $0x38] sm:$0x1]
      %v1927 = vld [vmem:[#allocation3 + $0x3c] sm:$0xf]
      %v1928 = vld [vmem:[#allocation3 + $0x40] sm:$0xf]
      %v1929 = vld [vmem:[#allocation3 + $0x44] sm:$0x1]
      %v1930 = vld [vmem:[#allocation3 + $0x48] sm:$0xf]
      %v1931 = vld [vmem:[#allocation3 + $0x4c] sm:$0xf]
      %v1932 = vld [vmem:[#allocation3 + $0x50] sm:$0x1]
      %v1933 = vld [vmem:[#allocation3 + $0x54] sm:$0xf]
      %v1934 = vld [vmem:[#allocation3 + $0x58] sm:$0xf]
      %v1935 = vld [vmem:[#allocation3 + $0x5c] sm:$0x1]
      %v1936 = vld [vmem:[#allocation3 + $0x60] sm:$0xf]
      %v1937 = vld [vmem:[#allocation3 + $0x64] sm:$0xf]
      %v1938 = vld [vmem:[#allocation3 + $0x68] sm:$0x1]
      %v1939 = vld [vmem:[#allocation3 + $0x6c] sm:$0xf]
      %v1940 = vld [vmem:[#allocation3 + $0x70] sm:$0xf]
      %v1941 = vld [vmem:[#allocation3 + $0x74] sm:$0x1]
      %v1958 = vunpack.c.l.b16 %v1912
      %v1959 = vunpack.c.l.b16 %v1913
      %v1960 = vunpack.c.l.b16 %v1915
      %v1961 = vunpack.c.l.b16 %v1916
      %v1962 = vunpack.c.l.b16 %v1918
      %v1963 = vunpack.c.l.b16 %v1919
      %v1964 = vunpack.c.l.b16 %v1921
      %v1965 = vunpack.c.l.b16 %v1922
      %v1966 = vunpack.c.l.b16 %v1924
      %v1967 = vunpack.c.l.b16 %v1925
      %v1968 = vunpack.c.l.b16 %v1927
      %v1969 = vunpack.c.l.b16 %v1928
      %v1970 = vunpack.c.l.b16 %v1930
      %v1971 = vunpack.c.l.b16 %v1931
      %v1972 = vunpack.c.l.b16 %v1933
      %v1973 = vunpack.c.l.b16 %v1934
      %v1974 = vpack.c.b16 %v1959, %v1958
      %v1975 = vpack.c.b16 %v1961, %v1960
      %v1976 = vpack.c.b16 %v1963, %v1962
      %v1977 = vpack.c.b16 %v1965, %v1964
      %v1978 = vpack.c.b16 %v1967, %v1966
      %v1979 = vpack.c.b16 %v1969, %v1968
      %v1980 = vpack.c.b16 %v1971, %v1970
      %v1981 = vpack.c.b16 %v1973, %v1972
      %v1990 = vunpack.c.l.b16 %v1914
      %v1991 = vunpack.c.l.b16 %v1917
      %v1992 = vunpack.c.l.b16 %v1920
      %v1993 = vunpack.c.l.b16 %v1923
      %v1994 = vunpack.c.l.b16 %v1926
      %v1995 = vunpack.c.l.b16 %v1929
      %v1996 = vunpack.c.l.b16 %v1932
      %v1997 = vunpack.c.l.b16 %v1935
      %v1998 = vpack.c.b16 %v1990, %v1990
      %v1999 = vpack.c.b16 %v1991, %v1991
      %v2000 = vpack.c.b16 %v1992, %v1992
      %v2001 = vpack.c.b16 %v1993, %v1993
      %v2002 = vpack.c.b16 %v1994, %v1994
      %v2003 = vpack.c.b16 %v1995, %v1995
      %v2004 = vpack.c.b16 %v1996, %v1996
      %v2005 = vpack.c.b16 %v1997, %v1997
      %v2007 = vshrl.u32 %v1974, 16
      %v2009 = vshll.u32 %v1974, 16
      %v2011 = vrot.slane %v2009, 1
      %v2012 = vor.u32 %v2007, %v2011
      %v2014 = vshll.u32 %v1998, 16
      %v2016 = vrot.slane %v2014, 1
      %v2017 = vsel %vm877, %v2012, %v2016
      %v2019 = vshrl.u32 %v1975, 16
      %v2021 = vshll.u32 %v1975, 16
      %v2023 = vrot.slane %v2021, 1
      %v2024 = vor.u32 %v2019, %v2023
      %v2026 = vshll.u32 %v1999, 16
      %v2028 = vrot.slane %v2026, 1
      %v2029 = vsel %vm877, %v2024, %v2028
      %v2031 = vshrl.u32 %v1976, 16
      %v2033 = vshll.u32 %v1976, 16
      %v2035 = vrot.slane %v2033, 1
      %v2036 = vor.u32 %v2031, %v2035
      %v2038 = vshll.u32 %v2000, 16
      %v2040 = vrot.slane %v2038, 1
      %v2041 = vsel %vm877, %v2036, %v2040
      %v2043 = vshrl.u32 %v1977, 16
      %v2045 = vshll.u32 %v1977, 16
      %v2047 = vrot.slane %v2045, 1
      %v2048 = vor.u32 %v2043, %v2047
      %v2050 = vshll.u32 %v2001, 16
      %v2052 = vrot.slane %v2050, 1
      %v2053 = vsel %vm877, %v2048, %v2052
      %v2055 = vshrl.u32 %v1978, 16
      %v2057 = vshll.u32 %v1978, 16
      %v2059 = vrot.slane %v2057, 1
      %v2060 = vor.u32 %v2055, %v2059
      %v2062 = vshll.u32 %v2002, 16
      %v2064 = vrot.slane %v2062, 1
      %v2065 = vsel %vm877, %v2060, %v2064
      %v2067 = vshrl.u32 %v1979, 16
      %v2069 = vshll.u32 %v1979, 16
      %v2071 = vrot.slane %v2069, 1
      %v2072 = vor.u32 %v2067, %v2071
      %v2074 = vshll.u32 %v2003, 16
      %v2076 = vrot.slane %v2074, 1
      %v2077 = vsel %vm877, %v2072, %v2076
      %v2079 = vshrl.u32 %v1980, 16
      %v2081 = vshll.u32 %v1980, 16
      %v2083 = vrot.slane %v2081, 1
      %v2084 = vor.u32 %v2079, %v2083
      %v2086 = vshll.u32 %v2004, 16
      %v2088 = vrot.slane %v2086, 1
      %v2089 = vsel %vm877, %v2084, %v2088
      %v2091 = vshrl.u32 %v1981, 16
      %v2093 = vshll.u32 %v1981, 16
      %v2095 = vrot.slane %v2093, 1
      %v2096 = vor.u32 %v2091, %v2095
      %v2098 = vshll.u32 %v2005, 16
      %v2100 = vrot.slane %v2098, 1
      %v2101 = vsel %vm877, %v2096, %v2100
      %2102 = vrot.lane.b32.xlu0 %v2017, 8
      %v2103 = vpop.permute.xlu0 %2102
      %2104 = vrot.lane.b32.xlu0 %v2029, 8
      %v2105 = vpop.permute.xlu0 %2104
      %2106 = vrot.lane.b32.xlu0 %v2041, 8
      %v2107 = vpop.permute.xlu0 %2106
      %2108 = vrot.lane.b32.xlu0 %v2053, 8
      %v2109 = vpop.permute.xlu0 %2108
      %2110 = vrot.lane.b32.xlu0 %v2065, 8
      %v2111 = vpop.permute.xlu0 %2110
      %2112 = vrot.lane.b32.xlu0 %v2077, 8
      %v2113 = vpop.permute.xlu0 %2112
      %2114 = vrot.lane.b32.xlu0 %v2089, 8
      %v2115 = vpop.permute.xlu0 %2114
      %2116 = vrot.lane.b32.xlu0 %v2101, 8
      %v2117 = vpop.permute.xlu0 %2116
      %v2118 = vrot.slane %v1974, 1
      %v2119 = vrot.slane %v1998, 1
      %v2120 = vsel %vm1018, %v2118, %v2119
      %v2121 = vrot.slane %v1975, 1
      %v2122 = vrot.slane %v1999, 1
      %v2123 = vsel %vm1018, %v2121, %v2122
      %v2124 = vrot.slane %v1976, 1
      %v2125 = vrot.slane %v2000, 1
      %v2126 = vsel %vm1018, %v2124, %v2125
      %v2127 = vrot.slane %v1977, 1
      %v2128 = vrot.slane %v2001, 1
      %v2129 = vsel %vm1018, %v2127, %v2128
      %v2130 = vrot.slane %v1978, 1
      %v2131 = vrot.slane %v2002, 1
      %v2132 = vsel %vm1018, %v2130, %v2131
      %v2133 = vrot.slane %v1979, 1
      %v2134 = vrot.slane %v2003, 1
      %v2135 = vsel %vm1018, %v2133, %v2134
      %v2136 = vrot.slane %v1980, 1
      %v2137 = vrot.slane %v2004, 1
      %v2138 = vsel %vm1018, %v2136, %v2137
      %v2139 = vrot.slane %v1981, 1
      %v2140 = vrot.slane %v2005, 1
      %v2141 = vsel %vm1018, %v2139, %v2140
      %2142 = vrot.lane.b32.xlu0 %v2120, 16
      %v2143 = vpop.permute.xlu0 %2142
      %2144 = vrot.lane.b32.xlu0 %v2123, 16
      %v2145 = vpop.permute.xlu0 %2144
      %2146 = vrot.lane.b32.xlu0 %v2126, 16
      %v2147 = vpop.permute.xlu0 %2146
      %2148 = vrot.lane.b32.xlu0 %v2129, 16
      %v2149 = vpop.permute.xlu0 %2148
      %2150 = vrot.lane.b32.xlu0 %v2132, 16
      %v2151 = vpop.permute.xlu0 %2150
      %2152 = vrot.lane.b32.xlu0 %v2135, 16
      %v2153 = vpop.permute.xlu0 %2152
      %2154 = vrot.lane.b32.xlu0 %v2138, 16
      %v2155 = vpop.permute.xlu0 %2154
      %2156 = vrot.lane.b32.xlu0 %v2141, 16
      %v2157 = vpop.permute.xlu0 %2156
      %v2160 = vunpack.c.l.b16 %v1936
      %v2161 = vunpack.c.l.b16 %v1937
      %v2162 = vpack.c.b16 %v2161, %v2160
      %2163 = vrot.lane.b32.xlu0 %v1975, 24
      %v2164 = vpop.permute.xlu0 %2163
      %2165 = vrot.lane.b32.xlu0 %v1976, 24
      %v2166 = vpop.permute.xlu0 %2165
      %2167 = vrot.lane.b32.xlu0 %v1977, 24
      %v2168 = vpop.permute.xlu0 %2167
      %2169 = vrot.lane.b32.xlu0 %v1978, 24
      %v2170 = vpop.permute.xlu0 %2169
      %2171 = vrot.lane.b32.xlu0 %v1979, 24
      %v2172 = vpop.permute.xlu0 %2171
      %2173 = vrot.lane.b32.xlu0 %v1980, 24
      %v2174 = vpop.permute.xlu0 %2173
      %2175 = vrot.lane.b32.xlu0 %v1981, 24
      %v2176 = vpop.permute.xlu0 %2175
      %2177 = vrot.lane.b32.xlu0 %v2162, 24
      %v2178 = vpop.permute.xlu0 %2177
      %v2180 = vunpack.c.l.b16 %v1938
      %v2181 = vpack.c.b16 %v2180, %v2180
      %v2183 = vshrl.u32 %v2162, 16
      %v2185 = vshll.u32 %v2162, 16
      %v2187 = vrot.slane %v2185, 1
      %v2188 = vor.u32 %v2183, %v2187
      %v2190 = vshll.u32 %v2181, 16
      %v2192 = vrot.slane %v2190, 1
      %v2193 = vsel %vm877, %v2188, %v2192
      %2194 = vrot.lane.b32.xlu0 %v2029, 32
      %v2195 = vpop.permute.xlu0 %2194
      %2196 = vrot.lane.b32.xlu0 %v2041, 32
      %v2197 = vpop.permute.xlu0 %2196
      %2198 = vrot.lane.b32.xlu0 %v2053, 32
      %v2199 = vpop.permute.xlu0 %2198
      %2200 = vrot.lane.b32.xlu0 %v2065, 32
      %v2201 = vpop.permute.xlu0 %2200
      %2202 = vrot.lane.b32.xlu0 %v2077, 32
      %v2203 = vpop.permute.xlu0 %2202
      %2204 = vrot.lane.b32.xlu0 %v2089, 32
      %v2205 = vpop.permute.xlu0 %2204
      %2206 = vrot.lane.b32.xlu0 %v2101, 32
      %v2207 = vpop.permute.xlu0 %2206
      %2208 = vrot.lane.b32.xlu0 %v2193, 32
      %v2209 = vpop.permute.xlu0 %2208
      %v2210 = vrot.slane %v2162, 1
      %v2211 = vrot.slane %v2181, 1
      %v2212 = vsel %vm1018, %v2210, %v2211
      %2213 = vrot.lane.b32.xlu0 %v2123, 40
      %v2214 = vpop.permute.xlu0 %2213
      %2215 = vrot.lane.b32.xlu0 %v2126, 40
      %v2216 = vpop.permute.xlu0 %2215
      %2217 = vrot.lane.b32.xlu0 %v2129, 40
      %v2218 = vpop.permute.xlu0 %2217
      %2219 = vrot.lane.b32.xlu0 %v2132, 40
      %v2220 = vpop.permute.xlu0 %2219
      %2221 = vrot.lane.b32.xlu0 %v2135, 40
      %v2222 = vpop.permute.xlu0 %2221
      %2223 = vrot.lane.b32.xlu0 %v2138, 40
      %v2224 = vpop.permute.xlu0 %2223
      %2225 = vrot.lane.b32.xlu0 %v2141, 40
      %v2226 = vpop.permute.xlu0 %2225
      %2227 = vrot.lane.b32.xlu0 %v2212, 40
      %v2228 = vpop.permute.xlu0 %2227
      %v2231 = vunpack.c.l.b16 %v1939
      %v2232 = vunpack.c.l.b16 %v1940
      %v2233 = vpack.c.b16 %v2232, %v2231
      %2234 = vrot.lane.b32.xlu0 %v1976, 48
      %v2235 = vpop.permute.xlu0 %2234
      %2236 = vrot.lane.b32.xlu0 %v1977, 48
      %v2237 = vpop.permute.xlu0 %2236
      %2238 = vrot.lane.b32.xlu0 %v1978, 48
      %v2239 = vpop.permute.xlu0 %2238
      %2240 = vrot.lane.b32.xlu0 %v1979, 48
      %v2241 = vpop.permute.xlu0 %2240
      %2242 = vrot.lane.b32.xlu0 %v1980, 48
      %v2243 = vpop.permute.xlu0 %2242
      %2244 = vrot.lane.b32.xlu0 %v1981, 48
      %v2245 = vpop.permute.xlu0 %2244
      %2246 = vrot.lane.b32.xlu0 %v2162, 48
      %v2247 = vpop.permute.xlu0 %2246
      %2248 = vrot.lane.b32.xlu0 %v2233, 48
      %v2249 = vpop.permute.xlu0 %2248
      %v2251 = vunpack.c.l.b16 %v1941
      %v2252 = vpack.c.b16 %v2251, %v2251
      %v2254 = vshrl.u32 %v2233, 16
      %v2256 = vshll.u32 %v2233, 16
      %v2258 = vrot.slane %v2256, 1
      %v2259 = vor.u32 %v2254, %v2258
      %v2261 = vshll.u32 %v2252, 16
      %v2263 = vrot.slane %v2261, 1
      %v2264 = vsel %vm877, %v2259, %v2263
      %2265 = vrot.lane.b32.xlu0 %v2041, 56
      %v2266 = vpop.permute.xlu0 %2265
      %2267 = vrot.lane.b32.xlu0 %v2053, 56
      %v2268 = vpop.permute.xlu0 %2267
      %2269 = vrot.lane.b32.xlu0 %v2065, 56
      %v2270 = vpop.permute.xlu0 %2269
      %2271 = vrot.lane.b32.xlu0 %v2077, 56
      %v2272 = vpop.permute.xlu0 %2271
      %2273 = vrot.lane.b32.xlu0 %v2089, 56
      %v2274 = vpop.permute.xlu0 %2273
      %2275 = vrot.lane.b32.xlu0 %v2101, 56
      %v2276 = vpop.permute.xlu0 %2275
      %2277 = vrot.lane.b32.xlu0 %v2193, 56
      %v2278 = vpop.permute.xlu0 %2277
      %2279 = vrot.lane.b32.xlu0 %v2264, 56
      %v2280 = vpop.permute.xlu0 %2279
      %v2281 = vrot.slane %v2233, 1
      %v2282 = vrot.slane %v2252, 1
      %v2283 = vsel %vm1018, %v2281, %v2282
      %2284 = vrot.lane.b32.xlu0 %v2126, 64
      %v2285 = vpop.permute.xlu0 %2284
      %2286 = vrot.lane.b32.xlu0 %v2129, 64
      %v2287 = vpop.permute.xlu0 %2286
      %2288 = vrot.lane.b32.xlu0 %v2132, 64
      %v2289 = vpop.permute.xlu0 %2288
      %2290 = vrot.lane.b32.xlu0 %v2135, 64
      %v2291 = vpop.permute.xlu0 %2290
      %2292 = vrot.lane.b32.xlu0 %v2138, 64
      %v2293 = vpop.permute.xlu0 %2292
      %2294 = vrot.lane.b32.xlu0 %v2141, 64
      %v2295 = vpop.permute.xlu0 %2294
      %2296 = vrot.lane.b32.xlu0 %v2212, 64
      %v2297 = vpop.permute.xlu0 %2296
      %2298 = vrot.lane.b32.xlu0 %v2283, 64
      %v2299 = vpop.permute.xlu0 %2298
      %v2301 = vsel %vm1235, %v1974, %v2103
      %v2303 = vsel %vm1235, %v1975, %v2105
      %v2305 = vsel %vm1235, %v1976, %v2107
      %v2307 = vsel %vm1235, %v1977, %v2109
      %v2309 = vsel %vm1235, %v1978, %v2111
      %v2311 = vsel %vm1235, %v1979, %v2113
      %v2313 = vsel %vm1235, %v1980, %v2115
      %v2315 = vsel %vm1235, %v1981, %v2117
      %v2317 = vsel %vm1256, %v2301, %v2143
      %v2319 = vsel %vm1256, %v2303, %v2145
      %v2321 = vsel %vm1256, %v2305, %v2147
      %v2323 = vsel %vm1256, %v2307, %v2149
      %v2325 = vsel %vm1256, %v2309, %v2151
      %v2327 = vsel %vm1256, %v2311, %v2153
      %v2329 = vsel %vm1256, %v2313, %v2155
      %v2331 = vsel %vm1256, %v2315, %v2157
      %v2333 = vsel %vm1277, %v2317, %v2164
      %v2335 = vsel %vm1277, %v2319, %v2166
      %v2337 = vsel %vm1277, %v2321, %v2168
      %v2339 = vsel %vm1277, %v2323, %v2170
      %v2341 = vsel %vm1277, %v2325, %v2172
      %v2343 = vsel %vm1277, %v2327, %v2174
      %v2345 = vsel %vm1277, %v2329, %v2176
      %v2347 = vsel %vm1277, %v2331, %v2178
      %v2349 = vsel %vm1298, %v2333, %v2195
      %v2351 = vsel %vm1298, %v2335, %v2197
      %v2353 = vsel %vm1298, %v2337, %v2199
      %v2355 = vsel %vm1298, %v2339, %v2201
      %v2357 = vsel %vm1298, %v2341, %v2203
      %v2359 = vsel %vm1298, %v2343, %v2205
      %v2361 = vsel %vm1298, %v2345, %v2207
      %v2363 = vsel %vm1298, %v2347, %v2209
      %v2365 = vsel %vm1319, %v2349, %v2214
      %v2367 = vsel %vm1319, %v2351, %v2216
      %v2369 = vsel %vm1319, %v2353, %v2218
      %v2371 = vsel %vm1319, %v2355, %v2220
      %v2373 = vsel %vm1319, %v2357, %v2222
      %v2375 = vsel %vm1319, %v2359, %v2224
      %v2377 = vsel %vm1319, %v2361, %v2226
      %v2379 = vsel %vm1319, %v2363, %v2228
      %v2381 = vsel %vm1340, %v2365, %v2235
      %v2383 = vsel %vm1340, %v2367, %v2237
      %v2385 = vsel %vm1340, %v2369, %v2239
      %v2387 = vsel %vm1340, %v2371, %v2241
      %v2389 = vsel %vm1340, %v2373, %v2243
      %v2391 = vsel %vm1340, %v2375, %v2245
      %v2393 = vsel %vm1340, %v2377, %v2247
      %v2395 = vsel %vm1340, %v2379, %v2249
      %v2397 = vsel %vm1361, %v2381, %v2266
      %v2399 = vsel %vm1361, %v2383, %v2268
      %v2401 = vsel %vm1361, %v2385, %v2270
      %v2403 = vsel %vm1361, %v2387, %v2272
      %v2405 = vsel %vm1361, %v2389, %v2274
      %v2407 = vsel %vm1361, %v2391, %v2276
      %v2409 = vsel %vm1361, %v2393, %v2278
      %v2411 = vsel %vm1361, %v2395, %v2280
      %v2413 = vsel %vm1382, %v2397, %v2285
      %v2415 = vsel %vm1382, %v2399, %v2287
      %v2417 = vsel %vm1382, %v2401, %v2289
      %v2419 = vsel %vm1382, %v2403, %v2291
      %v2421 = vsel %vm1382, %v2405, %v2293
      %v2423 = vsel %vm1382, %v2407, %v2295
      %v2425 = vsel %vm1382, %v2409, %v2297
      %v2427 = vsel %vm1382, %v2411, %v2299
      %v2428 = vld [vmem:[%s3] sm:$0xf]
      %v2429 = vld [vmem:[%s3 + $0x4] sm:$0xf]
      %v2430 = vld [vmem:[%s3 + $0x8] sm:$0xf]
      %v2431 = vld [vmem:[%s3 + $0xc] sm:$0xf]
      %v2432 = vld [vmem:[%s3 + $0x10] sm:$0xf]
      %v2433 = vld [vmem:[%s3 + $0x14] sm:$0xf]
      %v2434 = vld [vmem:[%s3 + $0x18] sm:$0xf]
      %v2435 = vld [vmem:[%s3 + $0x1c] sm:$0xf]
      %v2436 = vld [vmem:[%s3 + $0x20] sm:$0xf]
      %v2437 = vld [vmem:[%s4] sm:$0x1]
      %v2439 = vperm.slane %v2437, 0
      %v2450 = vunpack.c.l.b16 %v2428
      %v2451 = vunpack.c.l.b16 %v2429
      %v2452 = vunpack.c.l.b16 %v2430
      %v2453 = vunpack.c.l.b16 %v2431
      %v2454 = vunpack.c.l.b16 %v2432
      %v2455 = vunpack.c.l.b16 %v2433
      %v2456 = vunpack.c.l.b16 %v2434
      %v2457 = vunpack.c.l.b16 %v2435
      %v2458 = vunpack.c.l.b16 %v2436
      %v2459 = vpack.c.b16 %v2451, %v2450
      %v2460 = vpack.c.b16 %v2453, %v2452
      %v2461 = vpack.c.b16 %v2455, %v2454
      %v2462 = vpack.c.b16 %v2457, %v2456
      %v2463 = vpack.c.b16 %v2458, %v2458
      %v2468 = vsel %vm1443, %v2413, 0
      %v2470 = vsel %vm1443, %v2415, 0
      %v2472 = vsel %vm1443, %v2417, 0
      %v2474 = vsel %vm1443, %v2419, 0
      %v2476 = vsel %vm1443, %v2421, 0
      %v2478 = vsel %vm1443, %v2423, 0
      %v2480 = vsel %vm1443, %v2425, 0
      %v2482 = vsel %vm1443, %v2427, 0
      %v2485 = vsel %vm1464, %v2463, 0
      %2487 = vmatpush.bf16.msra.mxu0 0
      %2488 = vmatpush.bf16.msra.mxu0 0
      %2489 = vmatpush.bf16.msra.mxu0 0
      %2490 = vmatpush.bf16.msra.mxu0 %v2485
      %2491 = vmatpush.bf16.msra.mxu0 %v2462
      %2492 = vmatpush.bf16.msra.mxu0 %v2461
      %2493 = vmatpush.bf16.msra.mxu0 %v2460
      %2494 = vmatpush.bf16.msra.mxu0 %v2459
      %2495 = vmatmul.bf16.gmra.mxu0 %v2468
      %v2496 = vpop.f32.mrf.mxu0
      %v2497 = vadd.f32 %v2439, %v2496
      %v2498 = vpop.f32.mrf.mxu0
      %v2499 = vadd.f32 %v2439, %v2498
      %2500 = vmatmul.bf16.gmra.mxu0 %v2470
      %v2501 = vpop.f32.mrf.mxu0
      %v2502 = vadd.f32 %v2439, %v2501
      %v2503 = vpop.f32.mrf.mxu0
      %v2504 = vadd.f32 %v2439, %v2503
      %2505 = vmatmul.bf16.gmra.mxu0 %v2472
      %v2506 = vpop.f32.mrf.mxu0
      %v2507 = vadd.f32 %v2439, %v2506
      %v2508 = vpop.f32.mrf.mxu0
      %v2509 = vadd.f32 %v2439, %v2508
      %2510 = vmatmul.bf16.gmra.mxu0 %v2474
      %v2511 = vpop.f32.mrf.mxu0
      %v2512 = vadd.f32 %v2439, %v2511
      %v2513 = vpop.f32.mrf.mxu0
      %v2514 = vadd.f32 %v2439, %v2513
      %2515 = vmatmul.bf16.gmra.mxu0 %v2476
      %v2516 = vpop.f32.mrf.mxu0
      %v2517 = vadd.f32 %v2439, %v2516
      %v2518 = vpop.f32.mrf.mxu0
      %v2519 = vadd.f32 %v2439, %v2518
      %2520 = vmatmul.bf16.gmra.mxu0 %v2478
      %v2521 = vpop.f32.mrf.mxu0
      %v2522 = vadd.f32 %v2439, %v2521
      %v2523 = vpop.f32.mrf.mxu0
      %v2524 = vadd.f32 %v2439, %v2523
      %2525 = vmatmul.bf16.gmra.mxu0 %v2480
      %v2526 = vpop.f32.mrf.mxu0
      %v2527 = vadd.f32 %v2439, %v2526
      %v2528 = vpop.f32.mrf.mxu0
      %v2529 = vadd.f32 %v2439, %v2528
      %2530 = vmatmul.bf16.gmra.mxu0 %v2482
      %v2531 = vpop.f32.mrf.mxu0
      %v2532 = vadd.f32 %v2439, %v2531
      %v2533 = vpop.f32.mrf.mxu0
      %v2534 = vadd.f32 %v2439, %v2533
      %2535 = vdwg.mxu0
      %v2536 = vld [vmem:[%s330] sm:$0xff]
      %v2537 = vld [vmem:[%s330 + $0x8] sm:$0xff]
      %v2538 = vld [vmem:[%s330 + $0x10] sm:$0xff]
      %v2539 = vld [vmem:[%s330 + $0x18] sm:$0xff]
      %v2540 = vld [vmem:[%s330 + $0x20] sm:$0xff]
      %v2541 = vld [vmem:[%s330 + $0x28] sm:$0xff]
      %v2542 = vld [vmem:[%s330 + $0x30] sm:$0xff]
      %v2543 = vld [vmem:[%s330 + $0x38] sm:$0xff]
      %v2544 = vld [vmem:[%s330 + $0x40] sm:$0xff]
      %v2545 = vld [vmem:[%s330 + $0x48] sm:$0xff]
      %v2546 = vld [vmem:[%s330 + $0x50] sm:$0xff]
      %v2547 = vld [vmem:[%s330 + $0x58] sm:$0xff]
      %v2548 = vld [vmem:[%s330 + $0x60] sm:$0xff]
      %v2549 = vld [vmem:[%s330 + $0x68] sm:$0xff]
      %v2550 = vld [vmem:[%s330 + $0x70] sm:$0xff]
      %v2551 = vld [vmem:[%s330 + $0x78] sm:$0xff]
      %v2552 = vadd.f32 %v2497, %v2536
      %v2553 = vadd.f32 %v2499, %v2537
      %v2554 = vadd.f32 %v2502, %v2538
      %v2555 = vadd.f32 %v2504, %v2539
      %v2556 = vadd.f32 %v2507, %v2540
      %v2557 = vadd.f32 %v2509, %v2541
      %v2558 = vadd.f32 %v2512, %v2542
      %v2559 = vadd.f32 %v2514, %v2543
      %v2560 = vadd.f32 %v2517, %v2544
      %v2561 = vadd.f32 %v2519, %v2545
      %v2562 = vadd.f32 %v2522, %v2546
      %v2563 = vadd.f32 %v2524, %v2547
      %v2564 = vadd.f32 %v2527, %v2548
      %v2565 = vadd.f32 %v2529, %v2549
      %v2566 = vadd.f32 %v2532, %v2550
      %v2567 = vadd.f32 %v2534, %v2551
      %v2568 = vmax.f32 %v2552, 0.0
      %v2569 = vmax.f32 %v2553, 0.0
      %v2570 = vmax.f32 %v2554, 0.0
      %v2571 = vmax.f32 %v2555, 0.0
      %v2572 = vmax.f32 %v2556, 0.0
      %v2573 = vmax.f32 %v2557, 0.0
      %v2574 = vmax.f32 %v2558, 0.0
      %v2575 = vmax.f32 %v2559, 0.0
      %v2576 = vmax.f32 %v2560, 0.0
      %v2577 = vmax.f32 %v2561, 0.0
      %v2578 = vmax.f32 %v2562, 0.0
      %v2579 = vmax.f32 %v2563, 0.0
      %v2580 = vmax.f32 %v2564, 0.0
      %v2581 = vmax.f32 %v2565, 0.0
      %v2582 = vmax.f32 %v2566, 0.0
      %v2583 = vmax.f32 %v2567, 0.0
      %2584 = vst.msk [vmem:[%s248] sm:$0xff] %vm1235, %v2568
      %2585 = vst.msk [vmem:[%s248 + $0x8] sm:$0xff] %vm1235, %v2569
      %2586 = vst.msk [vmem:[%s248 + $0x10] sm:$0xff] %vm1235, %v2570
      %2587 = vst.msk [vmem:[%s248 + $0x18] sm:$0xff] %vm1235, %v2571
      %2588 = vst.msk [vmem:[%s248 + $0x20] sm:$0xff] %vm1235, %v2572
      %2589 = vst.msk [vmem:[%s248 + $0x28] sm:$0xff] %vm1235, %v2573
      %2590 = vst.msk [vmem:[%s248 + $0x30] sm:$0xff] %vm1235, %v2574
      %2591 = vst.msk [vmem:[%s248 + $0x38] sm:$0xff] %vm1235, %v2575
      %2592 = vst.msk [vmem:[%s248 + $0x40] sm:$0xff] %vm1235, %v2576
      %2593 = vst.msk [vmem:[%s248 + $0x48] sm:$0xff] %vm1235, %v2577
      %2594 = vst.msk [vmem:[%s248 + $0x50] sm:$0xff] %vm1235, %v2578
      %2595 = vst.msk [vmem:[%s248 + $0x58] sm:$0xff] %vm1235, %v2579
      %2596 = vst.msk [vmem:[%s248 + $0x60] sm:$0xff] %vm1235, %v2580
      %2597 = vst.msk [vmem:[%s248 + $0x68] sm:$0xff] %vm1235, %v2581
      %2598 = vst.msk [vmem:[%s248 + $0x70] sm:$0xff] %vm1235, %v2582
      %2599 = vst.msk [vmem:[%s248 + $0x78] sm:$0xff] %vm1235, %v2583
      %s2600 = smul.u32 8, %s21
      %p2601 = scmp.lt.s32.totalorder %s20, 1
      %s2602 = scalar_select %p2601, %s20, 1
      %p2603 = scmp.lt.s32.totalorder %s2600, 15
      %s2604 = scalar_select %p2603, %s2600, 15
      %s2605 = smul.addr %s2604, 2
      %s2606 = smul.addr %s2602, 32
      %s2607 = sadd.s32 %s2605, %s2606
      %s2608 = smul.addr %s2607, 8
      %s2609 = scalar_lea.vmem %s5, %s2608
      // Predicated region
      $region65: #{tpu_custom_call.1} parent=39 // pred_check
        %p2610 = pneg %p158
      $region66: #{tpu_custom_call.1} parent=39 // pred_check_branch
        %2612 = sbr.rel (%p2610) target = $region68
      $region67: #{tpu_custom_call.1} parent=39 // pred_region
        %s2613 = smul.u32 8, %s21
      $region68: #{tpu_custom_call.1} parent=39 // pred_fallthru
        _
    $region40: #{tpu_custom_call.1} parent=5 // pred_fallthru
      _
    %p2614 = scmp.le.s32.totalorder 2, %s11
    // Predicated region
    $region69: #{tpu_custom_call.1} parent=5 // pred_check
      %p2615 = pneg %p2614
    $region70: #{tpu_custom_call.1} parent=5 // pred_check_branch
      %2617 = sbr.rel (%p2615) target = $region72
    $region71: #{tpu_custom_call.1} parent=5 // pred_region
      %s2618 = ssub.s32 %s11, 2
      // Predicated region
      $region73: #{tpu_custom_call.1} parent=71 // pred_check
        %p2619 = pneg %p164
      $region74: #{tpu_custom_call.1} parent=71 // pred_check_branch
        %2621 = sbr.rel (%p2619) target = $region76
      $region75: #{tpu_custom_call.1} parent=71 // pred_region
        %s2622 = smul.u32 8, %s23
        %p2623 = scmp.lt.s32.totalorder %s22, 1
        %s2624 = scalar_select %p2623, %s22, 1
        %p2625 = scmp.lt.s32.totalorder %s2622, 15
        %s2626 = scalar_select %p2625, %s2622, 15
        %s2627 = smul.addr %s2626, 2
        %s2628 = smul.addr %s2624, 32
        %s2629 = sadd.s32 %s2627, %s2628
        %s2630 = smul.addr %s2629, 8
        %s2631 = scalar_lea.vmem %s5, %s2630
      $region76: #{tpu_custom_call.1} parent=71 // pred_fallthru
        _
    $region72: #{tpu_custom_call.1} parent=5 // pred_fallthru
      _
  $region6: #{tpu_custom_call.1} parent=0 // loop_footer
    %s15 = sadd.s32 1, %s11
  $region7: #{tpu_custom_call.1} parent=0 // loop_footer_branch
    %10 = sbr.rel target = $region3
  $region8: #{tpu_custom_call.1} parent=0 // loop_exit
    _

</llo_original>
